<compile_context>
chip_gen: v7x
topology: tpu7x:2x2x1
jax: 0.10.0
libtpu: 0.0.40
codegen_flags: <defaults>
</compile_context>

<pallas_src>
import math

import jax
import jax.numpy as jnp
from jax.experimental import pallas as pl
from jax.experimental.pallas import tpu as pltpu


def _hrq_kernel(x_ref, w_ref, nwsq_ref, quant_ref, codes_ref):
    # x_ref:     (TB, Dp)   f32  -- batch tile of inputs (squeezed, D padded to 128k)
    # w_ref:     (H, N, Dp) f32  -- all head codebooks (resident across grid steps)
    # nwsq_ref:  (H, N)     f32  -- precomputed -0.5 * ||w||^2 per code
    # quant_ref: (TB, Dp)   f32  -- sum over heads of selected embeddings
    # codes_ref: (H, TB)    i32  -- selected code index per head (lane-dense in TB)
    x = x_ref[...]
    tb = x.shape[0]
    num_heads, num_emb, _ = w_ref.shape

    nwsq = nwsq_ref[...]                                            # (H, N)
    lane_iota = jax.lax.broadcasted_iota(jnp.int32, (tb, num_emb), 1)  # hoisted

    resid = x
    acc = jnp.zeros_like(x)
    codes = []

    for h in range(num_heads):  # static unroll over heads (small)
        w = w_ref[h]                                                # (N, Dp)

        # argmax-equivalent score:  r.w - 0.5*||w||^2
        score = jax.lax.dot_general(
            resid, w, (((1,), (1,)), ((), ())),
            preferred_element_type=jnp.float32)                     # (TB, N)
        score = score + nwsq[h][None, :]

        # first-occurrence argmax over the codebook (lane) axis
        max_v = jnp.max(score, axis=-1, keepdims=True)              # (TB, 1)
        idx = jnp.min(jnp.where(score == max_v, lane_iota, num_emb),
                      axis=-1).astype(jnp.int32)                    # (TB,)
        codes.append(idx)

        # one-hot @ codebook == embedding row gather (exact for 0/1 one-hot)
        sel = (lane_iota == idx[:, None]).astype(jnp.float32)       # (TB, N)
        q_h = jnp.dot(sel, w, preferred_element_type=jnp.float32)   # (TB, Dp)

        resid = resid - q_h
        acc = acc + q_h

    quant_ref[...] = acc
    codes_ref[...] = jnp.stack(codes, axis=0)


def hrq_forward(inputs, embeddings, *, tb=128):
    """Eval-mode forward of HierarchicalRefinementQuantizer.

    inputs:     (B, 1, D) float32
    embeddings: (H, N, D) float32
    returns (loss (B,), quantized (B, 1, D), vq_codes: list of H arrays of (B,) int32)
    """
    b, one, d = inputs.shape
    assert one == 1
    h, n, d2 = embeddings.shape
    assert d2 == d

    d_pad = pl.cdiv(d, 128) * 128          # lane-dense quantized output
    n_tiles = pl.cdiv(b, tb)
    b_pad = n_tiles * tb                   # lane-dense codes output (lane = TB)

    x2d = inputs[:, 0, :].astype(jnp.float32)
    x2d = jnp.pad(x2d, ((0, b_pad - b), (0, d_pad - d)))
    w = jnp.pad(embeddings.astype(jnp.float32),
                ((0, 0), (0, 0), (0, d_pad - d)))
    neg_half_wsq = -0.5 * jnp.sum(embeddings.astype(jnp.float32) ** 2, axis=-1)

    quant, codes = pl.pallas_call(
        _hrq_kernel,
        out_shape=(
            jax.ShapeDtypeStruct((b_pad, d_pad), jnp.float32),   # quantized (flat)
            jax.ShapeDtypeStruct((h, b_pad), jnp.int32),         # codes
        ),
        grid=(n_tiles,),
        in_specs=[
            pl.BlockSpec((tb, d_pad), lambda i: (i, 0)),
            pl.BlockSpec((h, n, d_pad), lambda i: (0, 0, 0)),    # resident codebook
            pl.BlockSpec((h, n), lambda i: (0, 0)),              # resident -0.5*||w||^2
        ],
        out_specs=(
            pl.BlockSpec((tb, d_pad), lambda i: (i, 0)),
            pl.BlockSpec((h, tb), lambda i: (0, i)),
        ),
        compiler_params=pltpu.CompilerParams(
            dimension_semantics=("parallel",)),
    )(x2d, w, neg_half_wsq)

    quantized = quant[:b, :d].reshape(b, 1, d)
    vq_codes = [codes[i, :b] for i in range(h)]
    loss = jnp.zeros((b,), jnp.float32)    # eval mode, learnable_priors=None
    return loss, quantized, vq_codes


def init_hrq_embeddings(key, num_heads, num_embeddings, embedding_dim,
                        init_scale=1.0, init_decay_weight=0.5):
    """Deterministic xavier_uniform init with gain = 6.0 * scale * decay**h,
    matching the module __init__ (init_embeds_xavier=True)."""
    ws = []
    for hix in range(num_heads):
        gain = 6.0 * init_scale * (init_decay_weight ** hix)
        bound = gain * math.sqrt(6.0 / float(num_embeddings + embedding_dim))
        key, sub = jax.random.split(key)
        ws.append(jax.random.uniform(sub, (num_embeddings, embedding_dim),
                                     jnp.float32, -bound, bound))
    return jnp.stack(ws, axis=0)


def hrq_reference(inputs, embeddings):
    """Pure-JAX eval-mode reference using the module's full squared-distance formula."""
    x = inputs[:, 0, :].astype(jnp.float32)
    num_heads = embeddings.shape[0]
    resid = x
    quant = jnp.zeros_like(x)
    codes = []
    for hix in range(num_heads):
        w = embeddings[hix].astype(jnp.float32)
        dist = -(jnp.sum(resid ** 2, axis=1, keepdims=True)
                 + jnp.sum(w ** 2, axis=1)[None, :]
                 - 2.0 * resid @ w.T)
        idx = jnp.argmax(dist, axis=-1)
        codes.append(idx.astype(jnp.int32))
        q = w[idx]
        resid = resid - q
        quant = quant + q
    return (jnp.zeros((x.shape[0],), jnp.float32),
            quant.reshape(inputs.shape), codes)


if __name__ == "__main__":
    key = jax.random.PRNGKey(0)

    B, H, N, D = 256, 3, 16, 32  # batch, num_heads, num_embeddings, embedding_dim

    k_in, k_emb = jax.random.split(key)
    inputs = jax.random.normal(k_in, (B, 1, D), dtype=jnp.float32)
    embeddings = init_hrq_embeddings(k_emb, H, N, D)

    loss, quantized, vq_codes = hrq_forward(inputs, embeddings)
    jax.block_until_ready(quantized)
    jax.block_until_ready(loss)
    for c in vq_codes:
        jax.block_until_ready(c)

    assert loss.shape == (B,)
    assert quantized.shape == (B, 1, D)
    assert len(vq_codes) == H and all(c.shape == (B,) for c in vq_codes)

    ref_loss, ref_quant, ref_codes = hrq_reference(inputs, embeddings)
    for c, rc in zip(vq_codes, ref_codes):
        assert jnp.array_equal(c, rc), "vq_codes mismatch vs reference"
    assert jnp.allclose(quantized, ref_quant, rtol=1e-4, atol=1e-4), \
        "quantized mismatch vs reference"
    assert jnp.allclose(loss, ref_loss), "loss mismatch vs reference"

    print("KERNEL_OK")
</pallas_src>

<mosaic_0001>
module attributes {stable_mosaic.version = 11 : i64} {
  func.func @_hrq_kernel(%arg0: i32, %arg1: memref<128x128xf32, #tpu.memory_space<vmem>>, %arg2: memref<3x16x128xf32, #tpu.memory_space<vmem>>, %arg3: memref<3x16xf32, #tpu.memory_space<vmem>>, %arg4: memref<128x128xf32, #tpu.memory_space<vmem>>, %arg5: memref<3x128xi32, #tpu.memory_space<vmem>>) attributes {dimension_semantics = [#tpu.dimension_semantics<parallel>], iteration_bounds = array<i64: 2>, scalar_prefetch = 0 : i64, scratch_operands = 0 : i64, tpu.core_type = #tpu.core_type<tc>, window_params = [{transform_indices = @transform_0, window_bounds = array<i64: 128, 128>}, {pipeline_mode = #tpu.pipeline_mode<synchronous>, transform_indices = @transform_1, window_bounds = array<i64: 3, 16, 128>}, {pipeline_mode = #tpu.pipeline_mode<synchronous>, transform_indices = @transform_2, window_bounds = array<i64: 3, 16>}, {transform_indices = @transform_3, window_bounds = array<i64: 128, 128>}, {transform_indices = @transform_4, window_bounds = array<i64: 3, 128>}]} {
    %c0 = arith.constant 0 : index
    %c0_0 = arith.constant 0 : index
    %0 = vector.load %arg1[%c0, %c0_0] : memref<128x128xf32, #tpu.memory_space<vmem>>, vector<128x128xf32>
    %c0_1 = arith.constant 0 : index
    %c0_2 = arith.constant 0 : index
    %1 = vector.load %arg3[%c0_1, %c0_2] : memref<3x16xf32, #tpu.memory_space<vmem>>, vector<3x16xf32>
    %2 = tpu.iota {dimensions = array<i32: 1>} : vector<128x16xi32>
    %cst = arith.constant 0.000000e+00 : f32
    %3 = vector.broadcast %cst : f32 to vector<128x128xf32>
    %c0_3 = arith.constant 0 : index
    %c0_4 = arith.constant 0 : index
    %c0_5 = arith.constant 0 : index
    %4 = vector.load %arg2[%c0_3, %c0_4, %c0_5] : memref<3x16x128xf32, #tpu.memory_space<vmem>>, vector<1x16x128xf32>
    %5 = vector.shape_cast %4 : vector<1x16x128xf32> to vector<16x128xf32>
    %cst_6 = arith.constant dense<0.000000e+00> : vector<128x16xf32>
    %6 = tpu.matmul %0, %5, %cst_6 {dimension_numbers = #tpu.dot_dimension_numbers<[1], [1], [0], [0], [0, 0, 1, 0], [], []>} : vector<128x128xf32>, vector<16x128xf32>, vector<128x16xf32> -> vector<128x16xf32>
    %7 = vector.extract_strided_slice %1 {offsets = [0, 0], sizes = [1, 16], strides = [1, 1]} : vector<3x16xf32> to vector<1x16xf32>
    %8 = vector.shape_cast %7 : vector<1x16xf32> to vector<16xf32>
    %9 = vector.shape_cast %8 : vector<16xf32> to vector<1x16xf32>
    %10 = vector.broadcast %9 : vector<1x16xf32> to vector<128x16xf32>
    %11 = arith.addf %6, %10 : vector<128x16xf32>
    %cst_7 = arith.constant dense<0xFF800000> : vector<128xf32>
    %12 = vector.multi_reduction <maximumf>, %11, %cst_7 [1] : vector<128x16xf32> to vector<128xf32>
    %13 = vector.shape_cast %12 : vector<128xf32> to vector<128x1xf32>
    %14 = vector.broadcast %13 : vector<128x1xf32> to vector<128x16xf32>
    %15 = arith.cmpf oeq, %11, %14 : vector<128x16xf32>
    %c16_i32 = arith.constant 16 : i32
    %16 = vector.broadcast %c16_i32 : i32 to vector<128x16xi32>
    %17 = arith.select %15, %2, %16 : vector<128x16xi1>, vector<128x16xi32>
    %cst_8 = arith.constant dense<2147483647> : vector<128xi32>
    %18 = vector.multi_reduction <minsi>, %17, %cst_8 [1] : vector<128x16xi32> to vector<128xi32>
    %19 = vector.shape_cast %18 : vector<128xi32> to vector<128x1xi32>
    %20 = vector.broadcast %19 : vector<128x1xi32> to vector<128x16xi32>
    %21 = arith.cmpi eq, %2, %20 : vector<128x16xi32>
    %22 = arith.extui %21 : vector<128x16xi1> to vector<128x16xi32>
    %23 = arith.sitofp %22 : vector<128x16xi32> to vector<128x16xf32>
    %cst_9 = arith.constant dense<0.000000e+00> : vector<128x128xf32>
    %24 = tpu.matmul %23, %5, %cst_9 {dimension_numbers = #tpu.dot_dimension_numbers<[1], [0], [0], [1], [0, 0, 1, 1], [], []>} : vector<128x16xf32>, vector<16x128xf32>, vector<128x128xf32> -> vector<128x128xf32>
    %25 = arith.subf %0, %24 : vector<128x128xf32>
    %26 = arith.addf %3, %24 : vector<128x128xf32>
    %c1 = arith.constant 1 : index
    %c0_10 = arith.constant 0 : index
    %c0_11 = arith.constant 0 : index
    %27 = vector.load %arg2[%c1, %c0_10, %c0_11] : memref<3x16x128xf32, #tpu.memory_space<vmem>>, vector<1x16x128xf32>
    %28 = vector.shape_cast %27 : vector<1x16x128xf32> to vector<16x128xf32>
    %cst_12 = arith.constant dense<0.000000e+00> : vector<128x16xf32>
    %29 = tpu.matmul %25, %28, %cst_12 {dimension_numbers = #tpu.dot_dimension_numbers<[1], [1], [0], [0], [0, 0, 1, 0], [], []>} : vector<128x128xf32>, vector<16x128xf32>, vector<128x16xf32> -> vector<128x16xf32>
    %30 = vector.extract_strided_slice %1 {offsets = [1, 0], sizes = [1, 16], strides = [1, 1]} : vector<3x16xf32> to vector<1x16xf32>
    %31 = vector.shape_cast %30 : vector<1x16xf32> to vector<16xf32>
    %32 = vector.shape_cast %31 : vector<16xf32> to vector<1x16xf32>
    %33 = vector.broadcast %32 : vector<1x16xf32> to vector<128x16xf32>
    %34 = arith.addf %29, %33 : vector<128x16xf32>
    %cst_13 = arith.constant dense<0xFF800000> : vector<128xf32>
    %35 = vector.multi_reduction <maximumf>, %34, %cst_13 [1] : vector<128x16xf32> to vector<128xf32>
    %36 = vector.shape_cast %35 : vector<128xf32> to vector<128x1xf32>
    %37 = vector.broadcast %36 : vector<128x1xf32> to vector<128x16xf32>
    %38 = arith.cmpf oeq, %34, %37 : vector<128x16xf32>
    %c16_i32_14 = arith.constant 16 : i32
    %39 = vector.broadcast %c16_i32_14 : i32 to vector<128x16xi32>
    %40 = arith.select %38, %2, %39 : vector<128x16xi1>, vector<128x16xi32>
    %cst_15 = arith.constant dense<2147483647> : vector<128xi32>
    %41 = vector.multi_reduction <minsi>, %40, %cst_15 [1] : vector<128x16xi32> to vector<128xi32>
    %42 = vector.shape_cast %41 : vector<128xi32> to vector<128x1xi32>
    %43 = vector.broadcast %42 : vector<128x1xi32> to vector<128x16xi32>
    %44 = arith.cmpi eq, %2, %43 : vector<128x16xi32>
    %45 = arith.extui %44 : vector<128x16xi1> to vector<128x16xi32>
    %46 = arith.sitofp %45 : vector<128x16xi32> to vector<128x16xf32>
    %cst_16 = arith.constant dense<0.000000e+00> : vector<128x128xf32>
    %47 = tpu.matmul %46, %28, %cst_16 {dimension_numbers = #tpu.dot_dimension_numbers<[1], [0], [0], [1], [0, 0, 1, 1], [], []>} : vector<128x16xf32>, vector<16x128xf32>, vector<128x128xf32> -> vector<128x128xf32>
    %48 = arith.subf %25, %47 : vector<128x128xf32>
    %49 = arith.addf %26, %47 : vector<128x128xf32>
    %c2 = arith.constant 2 : index
    %c0_17 = arith.constant 0 : index
    %c0_18 = arith.constant 0 : index
    %50 = vector.load %arg2[%c2, %c0_17, %c0_18] : memref<3x16x128xf32, #tpu.memory_space<vmem>>, vector<1x16x128xf32>
    %51 = vector.shape_cast %50 : vector<1x16x128xf32> to vector<16x128xf32>
    %cst_19 = arith.constant dense<0.000000e+00> : vector<128x16xf32>
    %52 = tpu.matmul %48, %51, %cst_19 {dimension_numbers = #tpu.dot_dimension_numbers<[1], [1], [0], [0], [0, 0, 1, 0], [], []>} : vector<128x128xf32>, vector<16x128xf32>, vector<128x16xf32> -> vector<128x16xf32>
    %53 = vector.extract_strided_slice %1 {offsets = [2, 0], sizes = [1, 16], strides = [1, 1]} : vector<3x16xf32> to vector<1x16xf32>
    %54 = vector.shape_cast %53 : vector<1x16xf32> to vector<16xf32>
    %55 = vector.shape_cast %54 : vector<16xf32> to vector<1x16xf32>
    %56 = vector.broadcast %55 : vector<1x16xf32> to vector<128x16xf32>
    %57 = arith.addf %52, %56 : vector<128x16xf32>
    %cst_20 = arith.constant dense<0xFF800000> : vector<128xf32>
    %58 = vector.multi_reduction <maximumf>, %57, %cst_20 [1] : vector<128x16xf32> to vector<128xf32>
    %59 = vector.shape_cast %58 : vector<128xf32> to vector<128x1xf32>
    %60 = vector.broadcast %59 : vector<128x1xf32> to vector<128x16xf32>
    %61 = arith.cmpf oeq, %57, %60 : vector<128x16xf32>
    %c16_i32_21 = arith.constant 16 : i32
    %62 = vector.broadcast %c16_i32_21 : i32 to vector<128x16xi32>
    %63 = arith.select %61, %2, %62 : vector<128x16xi1>, vector<128x16xi32>
    %cst_22 = arith.constant dense<2147483647> : vector<128xi32>
    %64 = vector.multi_reduction <minsi>, %63, %cst_22 [1] : vector<128x16xi32> to vector<128xi32>
    %65 = vector.shape_cast %64 : vector<128xi32> to vector<128x1xi32>
    %66 = vector.broadcast %65 : vector<128x1xi32> to vector<128x16xi32>
    %67 = arith.cmpi eq, %2, %66 : vector<128x16xi32>
    %68 = arith.extui %67 : vector<128x16xi1> to vector<128x16xi32>
    %69 = arith.sitofp %68 : vector<128x16xi32> to vector<128x16xf32>
    %cst_23 = arith.constant dense<0.000000e+00> : vector<128x128xf32>
    %70 = tpu.matmul %69, %51, %cst_23 {dimension_numbers = #tpu.dot_dimension_numbers<[1], [0], [0], [1], [0, 0, 1, 1], [], []>} : vector<128x16xf32>, vector<16x128xf32>, vector<128x128xf32> -> vector<128x128xf32>
    %71 = arith.addf %49, %70 : vector<128x128xf32>
    %c0_24 = arith.constant 0 : index
    %c0_25 = arith.constant 0 : index
    %72 = vector.load %arg4[%c0_24, %c0_25] : memref<128x128xf32, #tpu.memory_space<vmem>>, vector<128x128xf32>
    tpu.vector_store %arg4[%c0_24, %c0_25], %71 {strides = array<i32>} : memref<128x128xf32, #tpu.memory_space<vmem>>, vector<128x128xf32>,
    %73 = vector.shape_cast %18 : vector<128xi32> to vector<1x128xi32>
    %74 = vector.shape_cast %41 : vector<128xi32> to vector<1x128xi32>
    %75 = vector.shape_cast %64 : vector<128xi32> to vector<1x128xi32>
    %76 = tpu.concatenate %73, %74, %75 in 0 : vector<1x128xi32>, vector<1x128xi32>, vector<1x128xi32> -> vector<3x128xi32>
    %c0_26 = arith.constant 0 : index
    %c0_27 = arith.constant 0 : index
    %77 = vector.load %arg5[%c0_26, %c0_27] : memref<3x128xi32, #tpu.memory_space<vmem>>, vector<3x128xi32>
    tpu.vector_store %arg5[%c0_26, %c0_27], %76 {strides = array<i32>} : memref<3x128xi32, #tpu.memory_space<vmem>>, vector<3x128xi32>,
    return
  }
  func.func @transform_0(%arg0: i32) -> (i32, i32) {
    %c0_i32 = arith.constant 0 : i32
    %c0_i32_0 = arith.constant 0 : i32
    return %arg0, %c0_i32 : i32, i32
  }
  func.func @transform_1(%arg0: i32) -> (i32, i32, i32) {
    %c0_i32 = arith.constant 0 : i32
    %c0_i32_0 = arith.constant 0 : i32
    %c0_i32_1 = arith.constant 0 : i32
    %c0_i32_2 = arith.constant 0 : i32
    return %c0_i32, %c0_i32_0, %c0_i32_1 : i32, i32, i32
  }
  func.func @transform_2(%arg0: i32) -> (i32, i32) {
    %c0_i32 = arith.constant 0 : i32
    %c0_i32_0 = arith.constant 0 : i32
    %c0_i32_1 = arith.constant 0 : i32
    return %c0_i32, %c0_i32_0 : i32, i32
  }
  func.func @transform_3(%arg0: i32) -> (i32, i32) {
    %c0_i32 = arith.constant 0 : i32
    %c0_i32_0 = arith.constant 0 : i32
    return %arg0, %c0_i32 : i32, i32
  }
  func.func @transform_4(%arg0: i32) -> (i32, i32) {
    %c0_i32 = arith.constant 0 : i32
    %c0_i32_0 = arith.constant 0 : i32
    return %c0_i32, %arg0 : i32, i32
  }
}

</mosaic_0001>

<llo_original>
// kernel: tpu_custom_call.1
$region0: #{tpu_custom_call.1}
  #allocation0 [shape = 'u32[]', space=smem, size = 0x4, offset = 0x4, fixed_abs, tag = 'smem constant byte address 0x4 - core index']
  #allocation1 [shape = 'u32[144,128]{1,0:T(1,128)}', space=vmem, size = 0x12000, scoped, tag = 'internal scratch']
  %s0 = inlined_call_operand.hbm [shape: f32[256,128], index: 0, kind: input, shape index: {}]
  %s1 = inlined_call_operand.hbm [shape: f32[3,16,128], index: 1, kind: input, shape index: {}]
  %s2 = inlined_call_operand.vmem [shape: f32[3,16], index: 2, kind: input, shape index: {}]
  %s3 = inlined_call_operand.hbm [shape: f32[256,128], index: 3, kind: output, shape index: {0}]
  %s4 = inlined_call_operand.hbm [shape: s32[3,256], index: 4, kind: output, shape index: {1}]
  %5 = xla_tuple %s3, %s4
  %s6 = sld [smem:[#allocation0]]
  $region61: #{tpu_custom_call.1} parent=0
    _
  %s8 = ssub.s32 1, %s6
  %s9 = scalar_select 0, %s8, %s6
  $region1: #{tpu_custom_call.1} parent=0
    #allocation2 [shape = 'u8[131072]{0}', space=vmem, size = 0x20000, scoped, tag = 'input window, operand 0']
    #allocation3 [shape = 's32[2]{0}', space=sflag, size = 0x8, scoped, tag = 'scoped memory for tpu_custom_call.1']
    #allocation4 [shape = 's32[2]{0}', space=sflag, size = 0x8, scoped, tag = 'scoped memory for tpu_custom_call.1']
    #allocation5 [shape = 'u8[24576]{0}', space=vmem, size = 0x6000, scoped, tag = 'input window, operand 1, single buffered']
    #allocation6 [shape = 's32[1]{0}', space=sflag, size = 0x4, scoped, tag = 'scoped memory for tpu_custom_call.1']
    #allocation7 [shape = 'u8[131072]{0}', space=vmem, size = 0x20000, scoped, tag = 'output window, operand 0']
    #allocation8 [shape = 'u8[4096]{0}', space=vmem, size = 0x1000, scoped, tag = 'output window, operand 1']
    #allocation9 [shape = 's32[2]{0}', space=sflag, size = 0x8, scoped, tag = 'scoped memory for tpu_custom_call.1']
    %10 = vsyncpa [#allocation3], 0
    %s11 = scalar_lea.sflag [#allocation3], 1
    %12 = vsyncpa %s11, 0
    %13 = vsyncpa [#allocation6], 0
    %14 = vsyncpa [#allocation4], 0
    %s15 = scalar_lea.sflag [#allocation4], 1
    %16 = vsyncpa %s15, 0
    %17 = vsyncpa [#allocation9], 0
    %s18 = scalar_lea.sflag [#allocation9], 1
    %19 = vsyncpa %s18, 0
    loop: start=0, step=1, limit=4
    $region2: #{tpu_custom_call.1} parent=1 // loop_pre_header
      _
    $region3: #{tpu_custom_call.1} parent=1 // loop_header
      %s21 = sphi 0, %s25
      %p22 = scmp.ge.s32.totalorder %s21, 4
      %s31 = sphi 0, %s33
      %s34 = sphi 0, %s31
      %s35 = sphi 0, %s34
      %s51 = sphi 0, %s35
      %s55 = sphi 0, %s55
      %s57 = sphi 0, %s55
      %s58 = sphi 0, %s57
      %s72 = sphi 0, %s58
      %s76 = sphi 0, %s76
      %s78 = sphi 0, %s76
      %s79 = sphi 0, %s78
      %s93 = sphi 0, %s79
      %s99 = sphi 0, %s101
      %s102 = sphi 0, %s99
      %s103 = sphi 0, %s102
      %s119 = sphi 0, %s103
      %s125 = sphi 0, %s127
      %s128 = sphi 0, %s125
      %s129 = sphi 0, %s128
      %s145 = sphi 0, %s129
    $region4: #{tpu_custom_call.1} parent=1 // loop_header_branch
      %24 = sbr.rel (%p22) target = $region8
    $region5: #{tpu_custom_call.1} parent=1 // loop_body
      %s26 = ssub.s32 %s21, 1
      %s27 = ssub.s32 %s21, 2
      %s28 = sadd.s32 %s21, 1
      %s29 = ssub.s32 %s21, %s28
      %p30 = scmp.eq.s32.totalorder %s29, 0
      %s32 = sadd.s32 %s31, 1
      %s33 = scalar_select %p30, %s31, %s32
      %p36 = pneg %p30
      %p37 = scmp.eq.s32.totalorder %s21, 1
      %p38 = por %p36, %p37
      %p39 = scmp.ne.s32.totalorder %s31, %s34
      %p40 = scmp.eq.s32.totalorder %s21, 0
      %p41 = por %p39, %p40
      %p42 = scmp.ne.s32.totalorder %s31, %s34
      %p43 = scmp.eq.s32.totalorder %s26, 1
      %p44 = por %p42, %p43
      %p45 = scmp.ne.s32.totalorder %s34, %s35
      %p46 = scmp.eq.s32.totalorder %s26, 0
      %p47 = por %p45, %p46
      %p48 = scmp.ne.s32.totalorder %s34, %s35
      %p49 = scmp.eq.s32.totalorder %s27, 1
      %p50 = por %p48, %p49
      %p52 = scmp.ne.s32.totalorder %s35, %s51
      %p53 = scmp.eq.s32.totalorder %s27, 0
      %p54 = por %p52, %p53
      %s56 = sadd.s32 %s55, 1
      %p59 = scmp.eq.s32.totalorder %s21, 1
      %p60 = scmp.ne.s32.totalorder %s55, %s57
      %p61 = scmp.eq.s32.totalorder %s21, 0
      %p62 = por %p60, %p61
      %p63 = scmp.ne.s32.totalorder %s55, %s57
      %p64 = scmp.eq.s32.totalorder %s26, 1
      %p65 = por %p63, %p64
      %p66 = scmp.ne.s32.totalorder %s57, %s58
      %p67 = scmp.eq.s32.totalorder %s26, 0
      %p68 = por %p66, %p67
      %p69 = scmp.ne.s32.totalorder %s57, %s58
      %p70 = scmp.eq.s32.totalorder %s27, 1
      %p71 = por %p69, %p70
      %p73 = scmp.ne.s32.totalorder %s58, %s72
      %p74 = scmp.eq.s32.totalorder %s27, 0
      %p75 = por %p73, %p74
      %s77 = sadd.s32 %s76, 1
      %p80 = scmp.eq.s32.totalorder %s21, 1
      %p81 = scmp.ne.s32.totalorder %s76, %s78
      %p82 = scmp.eq.s32.totalorder %s21, 0
      %p83 = por %p81, %p82
      %p84 = scmp.ne.s32.totalorder %s76, %s78
      %p85 = scmp.eq.s32.totalorder %s26, 1
      %p86 = por %p84, %p85
      %p87 = scmp.ne.s32.totalorder %s78, %s79
      %p88 = scmp.eq.s32.totalorder %s26, 0
      %p89 = por %p87, %p88
      %p90 = scmp.ne.s32.totalorder %s78, %s79
      %p91 = scmp.eq.s32.totalorder %s27, 1
      %p92 = por %p90, %p91
      %p94 = scmp.ne.s32.totalorder %s79, %s93
      %p95 = scmp.eq.s32.totalorder %s27, 0
      %p96 = por %p94, %p95
      %s97 = ssub.s32 %s21, %s28
      %p98 = scmp.eq.s32.totalorder %s97, 0
      %s100 = sadd.s32 %s99, 1
      %s101 = scalar_select %p98, %s99, %s100
      %p104 = pneg %p98
      %p105 = scmp.eq.s32.totalorder %s21, 1
      %p106 = por %p104, %p105
      %p107 = scmp.ne.s32.totalorder %s99, %s102
      %p108 = scmp.eq.s32.totalorder %s21, 0
      %p109 = por %p107, %p108
      %p110 = scmp.ne.s32.totalorder %s99, %s102
      %p111 = scmp.eq.s32.totalorder %s26, 1
      %p112 = por %p110, %p111
      %p113 = scmp.ne.s32.totalorder %s102, %s103
      %p114 = scmp.eq.s32.totalorder %s26, 0
      %p115 = por %p113, %p114
      %p116 = scmp.ne.s32.totalorder %s102, %s103
      %p117 = scmp.eq.s32.totalorder %s27, 1
      %p118 = por %p116, %p117
      %p120 = scmp.ne.s32.totalorder %s103, %s119
      %p121 = scmp.eq.s32.totalorder %s27, 0
      %p122 = por %p120, %p121
      %s123 = ssub.s32 %s21, %s28
      %p124 = scmp.eq.s32.totalorder %s123, 0
      %s126 = sadd.s32 %s125, 1
      %s127 = scalar_select %p124, %s125, %s126
      %p130 = pneg %p124
      %p131 = scmp.eq.s32.totalorder %s21, 1
      %p132 = por %p130, %p131
      %p133 = scmp.ne.s32.totalorder %s125, %s128
      %p134 = scmp.eq.s32.totalorder %s21, 0
      %p135 = por %p133, %p134
      %p136 = scmp.ne.s32.totalorder %s125, %s128
      %p137 = scmp.eq.s32.totalorder %s26, 1
      %p138 = por %p136, %p137
      %p139 = scmp.ne.s32.totalorder %s128, %s129
      %p140 = scmp.eq.s32.totalorder %s26, 0
      %p141 = por %p139, %p140
      %p142 = scmp.ne.s32.totalorder %s128, %s129
      %p143 = scmp.eq.s32.totalorder %s27, 1
      %p144 = por %p142, %p143
      %p146 = scmp.ne.s32.totalorder %s129, %s145
      %p147 = scmp.eq.s32.totalorder %s27, 0
      %p148 = por %p146, %p147
      %p149 = scmp.le.s32.totalorder 1, %s21
      %p150 = scmp.lt.s32.totalorder %s21, 3
      %p151 = pnand %p149, %p150
      %p152 = pneg %p151
      // Predicated region
      $region9: #{tpu_custom_call.1} parent=5 // pred_check
        _
      $region10: #{tpu_custom_call.1} parent=5 // pred_check_branch
        %154 = sbr.rel (%p151) target = $region12
      $region11: #{tpu_custom_call.1} parent=5 // pred_region
        %s155 = ssub.s32 %s21, 1
        // Predicated region
        $region13: #{tpu_custom_call.1} parent=11 // pred_check
          %p156 = pneg %p68
        $region14: #{tpu_custom_call.1} parent=11 // pred_check_branch
          %158 = sbr.rel (%p156) target = $region16
        $region15: #{tpu_custom_call.1} parent=11 // pred_region
          %s160 = ssub.s32 768, 768
          %161 = vsyncadd [#allocation6], %s160
          %s162 = sshll.u32 [#allocation5], 4
          %s163 = int_to_ptr.vmem [resolvable:$true] %s162
          %168 = dma.hbm_to_vmem [thread:$0]  %s1, 768, %s163, [#allocation6], 128, 128, 8
        $region16: #{tpu_custom_call.1} parent=11 // pred_fallthru
          _
        // Predicated region
        $region17: #{tpu_custom_call.1} parent=11 // pred_check
          %p169 = pneg %p89
        $region18: #{tpu_custom_call.1} parent=11 // pred_check_branch
          %171 = sbr.rel (%p169) target = $region20
        $region19: #{tpu_custom_call.1} parent=11 // pred_region
          _
        $region20: #{tpu_custom_call.1} parent=11 // pred_fallthru
          _
      $region12: #{tpu_custom_call.1} parent=5 // pred_fallthru
        _
      %p172 = scmp.lt.s32.totalorder %s21, 2
      // Predicated region
      $region21: #{tpu_custom_call.1} parent=5 // pred_check
        %p173 = pneg %p172
      $region22: #{tpu_custom_call.1} parent=5 // pred_check_branch
        %175 = sbr.rel (%p173) target = $region24
      $region23: #{tpu_custom_call.1} parent=5 // pred_region
        // Predicated region
        $region25: #{tpu_custom_call.1} parent=23 // pred_check
          %p176 = pneg %p41
        $region26: #{tpu_custom_call.1} parent=23 // pred_check_branch
          %178 = sbr.rel (%p176) target = $region28
        $region27: #{tpu_custom_call.1} parent=23 // pred_region
          %s179 = sand.u32 %s31, 1
          %s180 = scalar_lea.sflag [#allocation3], %s179
          %s181 = sand.u32 %s31, 1
          %s182 = smul.addr %s181, 128
          %s183 = scalar_lea.vmem [#allocation2], %s182
          %s184 = smul.u32 16, %s21
          %s186 = ssub.s32 2048, 2048
          %187 = vsyncadd %s180, %s186
          %s188 = smul.addr %s184, 128
          %s189 = scalar_lea.hbm %s0, %s188
          %s190 = sshll.u32 %s183, 4
          %s191 = int_to_ptr.vmem [resolvable:$true] %s190
          %196 = dma.hbm_to_vmem [thread:$0]  %s189, 2048, %s191, %s180, 128, 128, 8
        $region28: #{tpu_custom_call.1} parent=23 // pred_fallthru
          _
      $region24: #{tpu_custom_call.1} parent=5 // pred_fallthru
        _
      %p197 = scmp.le.s32.totalorder 1, %s21
      %p198 = scmp.lt.s32.totalorder %s21, 3
      %p199 = pnand %p197, %p198
      %p200 = pneg %p199
      // Predicated region
      $region29: #{tpu_custom_call.1} parent=5 // pred_check
        _
      $region30: #{tpu_custom_call.1} parent=5 // pred_check_branch
        %202 = sbr.rel (%p199) target = $region32
      $region31: #{tpu_custom_call.1} parent=5 // pred_region
        %s203 = ssub.s32 %s21, 1
        %s204 = sand.u32 %s34, 1
        %s205 = scalar_lea.sflag [#allocation3], %s204
        %s206 = sand.u32 %s34, 1
        %s207 = smul.addr %s206, 128
        %s208 = scalar_lea.vmem [#allocation2], %s207
        // Predicated region
        $region33: #{tpu_custom_call.1} parent=31 // pred_check
          %p209 = pneg %p47
        $region34: #{tpu_custom_call.1} parent=31 // pred_check_branch
          %211 = sbr.rel (%p209) target = $region36
        $region35: #{tpu_custom_call.1} parent=31 // pred_region
          %212 = dma.done %s205, 2048
        $region36: #{tpu_custom_call.1} parent=31 // pred_fallthru
          _
        // Predicated region
        $region37: #{tpu_custom_call.1} parent=31 // pred_check
          %p213 = pneg %p68
        $region38: #{tpu_custom_call.1} parent=31 // pred_check_branch
          %215 = sbr.rel (%p213) target = $region40
        $region39: #{tpu_custom_call.1} parent=31 // pred_region
          %216 = dma.done [#allocation6], 768
        $region40: #{tpu_custom_call.1} parent=31 // pred_fallthru
          _
        %s217 = sand.u32 %s34, 1
        %s218 = scalar_lea.sflag [#allocation3], %s217
        %s219 = sand.u32 %s34, 1
        %s220 = smul.addr %s219, 128
        %s221 = scalar_lea.vmem [#allocation2], %s220
        %p222 = pneg %p47
        %p223 = pneg %p44
        %p224 = pneg %p68
        %p225 = pneg %p65
        %p226 = pneg %p89
        %p227 = pneg %p86
        %p228 = pneg %p115
        %p229 = pneg %p112
        %s230 = sand.u32 %s102, 1
        %s231 = scalar_lea.sflag [#allocation4], %s230
        %s232 = sand.u32 %s102, 1
        %s233 = smul.addr %s232, 128
        %s234 = scalar_lea.vmem [#allocation7], %s233
        %p235 = pneg %p141
        %p236 = pneg %p138
        %s237 = sand.u32 %s128, 1
        %s238 = scalar_lea.sflag [#allocation9], %s237
        %s239 = sand.u32 %s128, 1
        %s240 = smul.addr %s239, 4
        %s241 = scalar_lea.vmem [#allocation8], %s240
        %s242 = smul.u32 16, %s26
        %s243 = smul.u32 16, %s26
        %v244 = vld [vmem:[%s208] sm:$0xff]
        %v245 = vld [vmem:[%s208 + $0x8] sm:$0xff]
        %v246 = vld [vmem:[%s208 + $0x10] sm:$0xff]
        %v247 = vld [vmem:[%s208 + $0x18] sm:$0xff]
        %v248 = vld [vmem:[%s208 + $0x20] sm:$0xff]
        %v249 = vld [vmem:[%s208 + $0x28] sm:$0xff]
        %v250 = vld [vmem:[%s208 + $0x30] sm:$0xff]
        %v251 = vld [vmem:[%s208 + $0x38] sm:$0xff]
        %v252 = vld [vmem:[%s208 + $0x40] sm:$0xff]
        %v253 = vld [vmem:[%s208 + $0x48] sm:$0xff]
        %v254 = vld [vmem:[%s208 + $0x50] sm:$0xff]
        %v255 = vld [vmem:[%s208 + $0x58] sm:$0xff]
        %v256 = vld [vmem:[%s208 + $0x60] sm:$0xff]
        %v257 = vld [vmem:[%s208 + $0x68] sm:$0xff]
        %v258 = vld [vmem:[%s208 + $0x70] sm:$0xff]
        %v259 = vld [vmem:[%s208 + $0x78] sm:$0xff]
        %v260 = vld [vmem:[%s2] sm:$0x7]
        %v261 = vlaneseq
        %v262 = vand.u32 %v261, 127
        %v263 = vld [vmem:[#allocation5] sm:$0xff]
        %v264 = vld [vmem:[#allocation5 + $0x8] sm:$0xff]
        %v265 = vlaneseq
        %v266 = vshrl.u32 %v265, 7
        %v267 = vsub.s32 0, %v266
        %v268 = vrot.slane %v260, %v267
        %269 = vmatprep.subr.mxu0 0.0
        %270 = vmatpush1.xpose.msra.mxu0 %v263
        %271 = vmatprep.subr.mxu0 0.0
        %272 = vmatpush1.xpose.msra.mxu0 %v264
        %273 = vmatprep.subr.mxu0 0.0
        %274 = vmatpush1.xpose.msra.mxu0 0.0
        %275 = vmatprep.subr.mxu0 0.0
        %276 = vmatpush1.xpose.msra.mxu0 0.0
        %277 = vmatprep.subr.mxu0 0.0
        %278 = vmatpush1.xpose.msra.mxu0 0.0
        %279 = vmatprep.subr.mxu0 0.0
        %280 = vmatpush1.xpose.msra.mxu0 0.0
        %281 = vmatprep.subr.mxu0 0.0
        %282 = vmatpush1.xpose.msra.mxu0 0.0
        %283 = vmatprep.subr.mxu0 0.0
        %284 = vmatpush1.xpose.msra.mxu0 0.0
        %285 = vmatprep.subr.mxu0 0.0
        %286 = vmatpush1.xpose.msra.mxu0 0.0
        %287 = vmatprep.subr.mxu0 0.0
        %288 = vmatpush1.xpose.msra.mxu0 0.0
        %289 = vmatprep.subr.mxu0 0.0
        %290 = vmatpush1.xpose.msra.mxu0 0.0
        %291 = vmatprep.subr.mxu0 0.0
        %292 = vmatpush1.xpose.msra.mxu0 0.0
        %293 = vmatprep.subr.mxu0 0.0
        %294 = vmatpush1.xpose.msra.mxu0 0.0
        %295 = vmatprep.subr.mxu0 0.0
        %296 = vmatpush1.xpose.msra.mxu0 0.0
        %297 = vmatprep.subr.mxu0 0.0
        %298 = vmatpush1.xpose.msra.mxu0 0.0
        %299 = vmatprep.subr.mxu0 0.0
        %300 = vmatpush1.xpose.msra.mxu0 0.0
        %301 = vmatprep.subr.mxu0 0.0
        %302 = vmatpush1.xpose.msra.mxu0 0.0
        %303 = vmatprep.subr.mxu0 0.0
        %304 = vmatpush1.xpose.msra.mxu0 0.0
        %305 = vmatprep.subr.mxu0 0.0
        %306 = vmatpush1.xpose.msra.mxu0 0.0
        %307 = vmatprep.subr.mxu0 0.0
        %308 = vmatpush1.xpose.msra.mxu0 0.0
        %309 = vmatprep.subr.mxu0 0.0
        %310 = vmatpush1.xpose.msra.mxu0 0.0
        %311 = vmatprep.subr.mxu0 0.0
        %312 = vmatpush1.xpose.msra.mxu0 0.0
        %313 = vmatprep.subr.mxu0 0.0
        %314 = vmatpush1.xpose.msra.mxu0 0.0
        %315 = vmatprep.subr.mxu0 0.0
        %316 = vmatpush1.xpose.msra.mxu0 0.0
        %317 = vmatprep.subr.mxu0 0.0
        %318 = vmatpush1.xpose.msra.mxu0 0.0
        %319 = vmatprep.subr.mxu0 0.0
        %320 = vmatpush1.xpose.msra.mxu0 0.0
        %321 = vmatprep.subr.mxu0 0.0
        %322 = vmatpush1.xpose.msra.mxu0 0.0
        %323 = vmatprep.subr.mxu0 0.0
        %324 = vmatpush1.xpose.msra.mxu0 0.0
        %325 = vmatprep.subr.mxu0 0.0
        %326 = vmatpush1.xpose.msra.mxu0 0.0
        %327 = vmatprep.subr.mxu0 0.0
        %328 = vmatpush1.xpose.msra.mxu0 0.0
        %329 = vmatprep.subr.mxu0 0.0
        %330 = vmatpush1.xpose.msra.mxu0 0.0
        %331 = vmatprep.subr.mxu0 0.0
        %332 = vmatpush1.xpose.msra.mxu0 0.0
        %333 = vmatprep.mubr.f32.mxu0 0.0
        %334 = vmatmul.mubr.f32.gmra.mrb[0].mxu0 %v244
        %v335 = vpop.f32.mrb[0].mxu0
        %v336 = vadd.f32 %v268, %v335
        %v337 = vpop.f32.mrb[0].mxu0
        %338 = vmatprep.mubr.f32.mxu0 0.0
        %339 = vmatmul.mubr.f32.gmra.mrb[0].mxu0 %v245
        %v340 = vpop.f32.mrb[0].mxu0
        %v341 = vadd.f32 %v268, %v340
        %v342 = vpop.f32.mrb[0].mxu0
        %343 = vmatprep.mubr.f32.mxu0 0.0
        %344 = vmatmul.mubr.f32.gmra.mrb[0].mxu0 %v246
        %v345 = vpop.f32.mrb[0].mxu0
        %v346 = vadd.f32 %v268, %v345
        %v347 = vpop.f32.mrb[0].mxu0
        %348 = vmatprep.mubr.f32.mxu0 0.0
        %349 = vmatmul.mubr.f32.gmra.mrb[0].mxu0 %v247
        %v350 = vpop.f32.mrb[0].mxu0
        %v351 = vadd.f32 %v268, %v350
        %v352 = vpop.f32.mrb[0].mxu0
        %353 = vmatprep.mubr.f32.mxu0 0.0
        %354 = vmatmul.mubr.f32.gmra.mrb[0].mxu0 %v248
        %v355 = vpop.f32.mrb[0].mxu0
        %v356 = vadd.f32 %v268, %v355
        %v357 = vpop.f32.mrb[0].mxu0
        %358 = vmatprep.mubr.f32.mxu0 0.0
        %359 = vmatmul.mubr.f32.gmra.mrb[0].mxu0 %v249
        %v360 = vpop.f32.mrb[0].mxu0
        %v361 = vadd.f32 %v268, %v360
        %v362 = vpop.f32.mrb[0].mxu0
        %363 = vmatprep.mubr.f32.mxu0 0.0
        %364 = vmatmul.mubr.f32.gmra.mrb[0].mxu0 %v250
        %v365 = vpop.f32.mrb[0].mxu0
        %v366 = vadd.f32 %v268, %v365
        %v367 = vpop.f32.mrb[0].mxu0
        %368 = vmatprep.mubr.f32.mxu0 0.0
        %369 = vmatmul.mubr.f32.gmra.mrb[0].mxu0 %v251
        %v370 = vpop.f32.mrb[0].mxu0
        %v371 = vadd.f32 %v268, %v370
        %v372 = vpop.f32.mrb[0].mxu0
        %373 = vmatprep.mubr.f32.mxu0 0.0
        %374 = vmatmul.mubr.f32.gmra.mrb[0].mxu0 %v252
        %v375 = vpop.f32.mrb[0].mxu0
        %v376 = vadd.f32 %v268, %v375
        %v377 = vpop.f32.mrb[0].mxu0
        %378 = vmatprep.mubr.f32.mxu0 0.0
        %379 = vmatmul.mubr.f32.gmra.mrb[0].mxu0 %v253
        %v380 = vpop.f32.mrb[0].mxu0
        %v381 = vadd.f32 %v268, %v380
        %v382 = vpop.f32.mrb[0].mxu0
        %383 = vmatprep.mubr.f32.mxu0 0.0
        %384 = vmatmul.mubr.f32.gmra.mrb[0].mxu0 %v254
        %v385 = vpop.f32.mrb[0].mxu0
        %v386 = vadd.f32 %v268, %v385
        %v387 = vpop.f32.mrb[0].mxu0
        %388 = vmatprep.mubr.f32.mxu0 0.0
        %389 = vmatmul.mubr.f32.gmra.mrb[0].mxu0 %v255
        %v390 = vpop.f32.mrb[0].mxu0
        %v391 = vadd.f32 %v268, %v390
        %v392 = vpop.f32.mrb[0].mxu0
        %393 = vmatprep.mubr.f32.mxu0 0.0
        %394 = vmatmul.mubr.f32.gmra.mrb[0].mxu0 %v256
        %v395 = vpop.f32.mrb[0].mxu0
        %v396 = vadd.f32 %v268, %v395
        %v397 = vpop.f32.mrb[0].mxu0
        %398 = vmatprep.mubr.f32.mxu0 0.0
        %399 = vmatmul.mubr.f32.gmra.mrb[0].mxu0 %v257
        %v400 = vpop.f32.mrb[0].mxu0
        %v401 = vadd.f32 %v268, %v400
        %v402 = vpop.f32.mrb[0].mxu0
        %403 = vmatprep.mubr.f32.mxu0 0.0
        %404 = vmatmul.mubr.f32.gmra.mrb[0].mxu0 %v258
        %v405 = vpop.f32.mrb[0].mxu0
        %v406 = vadd.f32 %v268, %v405
        %v407 = vpop.f32.mrb[0].mxu0
        %408 = vmatprep.mubr.f32.mxu0 0.0
        %409 = vmatmul.mubr.f32.gmra.mrb[0].mxu0 %v259
        %v410 = vpop.f32.mrb[0].mxu0
        %v411 = vadd.f32 %v268, %v410
        %v412 = vpop.f32.mrb[0].mxu0
        %413 = vdwg.mxu0
        %vm414 = vcmask 130048
        %v415 = vsel %vm414, %v336, -inf
        %416 = vmax.xlane.f32.xlu0 %v415
        %v417 = vpop.xlane.xlu0 %416
        %v418 = vsel %vm414, %v341, -inf
        %419 = vmax.xlane.f32.xlu0 %v418
        %v420 = vpop.xlane.xlu0 %419
        %v421 = vsel %vm414, %v346, -inf
        %422 = vmax.xlane.f32.xlu0 %v421
        %v423 = vpop.xlane.xlu0 %422
        %v424 = vsel %vm414, %v351, -inf
        %425 = vmax.xlane.f32.xlu0 %v424
        %v426 = vpop.xlane.xlu0 %425
        %v427 = vsel %vm414, %v356, -inf
        %428 = vmax.xlane.f32.xlu0 %v427
        %v429 = vpop.xlane.xlu0 %428
        %v430 = vsel %vm414, %v361, -inf
        %431 = vmax.xlane.f32.xlu0 %v430
        %v432 = vpop.xlane.xlu0 %431
        %v433 = vsel %vm414, %v366, -inf
        %434 = vmax.xlane.f32.xlu0 %v433
        %v435 = vpop.xlane.xlu0 %434
        %v436 = vsel %vm414, %v371, -inf
        %437 = vmax.xlane.f32.xlu0 %v436
        %v438 = vpop.xlane.xlu0 %437
        %v439 = vsel %vm414, %v376, -inf
        %440 = vmax.xlane.f32.xlu0 %v439
        %v441 = vpop.xlane.xlu0 %440
        %v442 = vsel %vm414, %v381, -inf
        %443 = vmax.xlane.f32.xlu0 %v442
        %v444 = vpop.xlane.xlu0 %443
        %v445 = vsel %vm414, %v386, -inf
        %446 = vmax.xlane.f32.xlu0 %v445
        %v447 = vpop.xlane.xlu0 %446
        %v448 = vsel %vm414, %v391, -inf
        %449 = vmax.xlane.f32.xlu0 %v448
        %v450 = vpop.xlane.xlu0 %449
        %v451 = vsel %vm414, %v396, -inf
        %452 = vmax.xlane.f32.xlu0 %v451
        %v453 = vpop.xlane.xlu0 %452
        %v454 = vsel %vm414, %v401, -inf
        %455 = vmax.xlane.f32.xlu0 %v454
        %v456 = vpop.xlane.xlu0 %455
        %v457 = vsel %vm414, %v406, -inf
        %458 = vmax.xlane.f32.xlu0 %v457
        %v459 = vpop.xlane.xlu0 %458
        %v460 = vsel %vm414, %v411, -inf
        %461 = vmax.xlane.f32.xlu0 %v460
        %v462 = vpop.xlane.xlu0 %461
        %vm463 = vcmp.eq.f32.partialorder %v336, %v417
        %vm464 = vcmp.eq.f32.partialorder %v341, %v420
        %vm465 = vcmp.eq.f32.partialorder %v346, %v423
        %vm466 = vcmp.eq.f32.partialorder %v351, %v426
        %vm467 = vcmp.eq.f32.partialorder %v356, %v429
        %vm468 = vcmp.eq.f32.partialorder %v361, %v432
        %vm469 = vcmp.eq.f32.partialorder %v366, %v435
        %vm470 = vcmp.eq.f32.partialorder %v371, %v438
        %vm471 = vcmp.eq.f32.partialorder %v376, %v441
        %vm472 = vcmp.eq.f32.partialorder %v381, %v444
        %vm473 = vcmp.eq.f32.partialorder %v386, %v447
        %vm474 = vcmp.eq.f32.partialorder %v391, %v450
        %vm475 = vcmp.eq.f32.partialorder %v396, %v453
        %vm476 = vcmp.eq.f32.partialorder %v401, %v456
        %vm477 = vcmp.eq.f32.partialorder %v406, %v459
        %vm478 = vcmp.eq.f32.partialorder %v411, %v462
        %v479 = vsel %vm463, %v262, 16
        %v480 = vsel %vm464, %v262, 16
        %v481 = vsel %vm465, %v262, 16
        %v482 = vsel %vm466, %v262, 16
        %v483 = vsel %vm467, %v262, 16
        %v484 = vsel %vm468, %v262, 16
        %v485 = vsel %vm469, %v262, 16
        %v486 = vsel %vm470, %v262, 16
        %v487 = vsel %vm471, %v262, 16
        %v488 = vsel %vm472, %v262, 16
        %v489 = vsel %vm473, %v262, 16
        %v490 = vsel %vm474, %v262, 16
        %v491 = vsel %vm475, %v262, 16
        %v492 = vsel %vm476, %v262, 16
        %v493 = vsel %vm477, %v262, 16
        %v494 = vsel %vm478, %v262, 16
        %v495 = vsel %vm414, %v479, 2147483647
        %v496 = vand.u32 %v495, 65535
        %v497 = vshra.s32 %v495, 16
        %v498 = vcvt.s32.f32 %v496
        %v499 = vcvt.s32.f32 %v497
        %500 = vmin.xlane.f32.xlu0 %v499
        %v501 = vpop.xlane.xlu0 %500
        %vm502 = vcmp.eq.f32.partialorder %v499, %v501
        %v503 = vsel %vm502, %v498, inf
        %504 = vmin.xlane.f32.xlu0 %v503
        %v505 = vpop.xlane.xlu0 %504
        %v506 = vcvt.f32.s32 %v505
        %v507 = vcvt.f32.s32 %v501
        %v508 = vshll.u32 %v507, 16
        %v509 = vadd.s32 %v508, %v506
        %v510 = vsel %vm414, %v480, 2147483647
        %v511 = vand.u32 %v510, 65535
        %v512 = vshra.s32 %v510, 16
        %v513 = vcvt.s32.f32 %v511
        %v514 = vcvt.s32.f32 %v512
        %515 = vmin.xlane.f32.xlu0 %v514
        %v516 = vpop.xlane.xlu0 %515
        %vm517 = vcmp.eq.f32.partialorder %v514, %v516
        %v518 = vsel %vm517, %v513, inf
        %519 = vmin.xlane.f32.xlu0 %v518
        %v520 = vpop.xlane.xlu0 %519
        %v521 = vcvt.f32.s32 %v520
        %v522 = vcvt.f32.s32 %v516
        %v523 = vshll.u32 %v522, 16
        %v524 = vadd.s32 %v523, %v521
        %v525 = vsel %vm414, %v481, 2147483647
        %v526 = vand.u32 %v525, 65535
        %v527 = vshra.s32 %v525, 16
        %v528 = vcvt.s32.f32 %v526
        %v529 = vcvt.s32.f32 %v527
        %530 = vmin.xlane.f32.xlu0 %v529
        %v531 = vpop.xlane.xlu0 %530
        %vm532 = vcmp.eq.f32.partialorder %v529, %v531
        %v533 = vsel %vm532, %v528, inf
        %534 = vmin.xlane.f32.xlu0 %v533
        %v535 = vpop.xlane.xlu0 %534
        %v536 = vcvt.f32.s32 %v535
        %v537 = vcvt.f32.s32 %v531
        %v538 = vshll.u32 %v537, 16
        %v539 = vadd.s32 %v538, %v536
        %v540 = vsel %vm414, %v482, 2147483647
        %v541 = vand.u32 %v540, 65535
        %v542 = vshra.s32 %v540, 16
        %v543 = vcvt.s32.f32 %v541
        %v544 = vcvt.s32.f32 %v542
        %545 = vmin.xlane.f32.xlu0 %v544
        %v546 = vpop.xlane.xlu0 %545
        %vm547 = vcmp.eq.f32.partialorder %v544, %v546
        %v548 = vsel %vm547, %v543, inf
        %549 = vmin.xlane.f32.xlu0 %v548
        %v550 = vpop.xlane.xlu0 %549
        %v551 = vcvt.f32.s32 %v550
        %v552 = vcvt.f32.s32 %v546
        %v553 = vshll.u32 %v552, 16
        %v554 = vadd.s32 %v553, %v551
        %v555 = vsel %vm414, %v483, 2147483647
        %v556 = vand.u32 %v555, 65535
        %v557 = vshra.s32 %v555, 16
        %v558 = vcvt.s32.f32 %v556
        %v559 = vcvt.s32.f32 %v557
        %560 = vmin.xlane.f32.xlu0 %v559
        %v561 = vpop.xlane.xlu0 %560
        %vm562 = vcmp.eq.f32.partialorder %v559, %v561
        %v563 = vsel %vm562, %v558, inf
        %564 = vmin.xlane.f32.xlu0 %v563
        %v565 = vpop.xlane.xlu0 %564
        %v566 = vcvt.f32.s32 %v565
        %v567 = vcvt.f32.s32 %v561
        %v568 = vshll.u32 %v567, 16
        %v569 = vadd.s32 %v568, %v566
        %v570 = vsel %vm414, %v484, 2147483647
        %v571 = vand.u32 %v570, 65535
        %v572 = vshra.s32 %v570, 16
        %v573 = vcvt.s32.f32 %v571
        %v574 = vcvt.s32.f32 %v572
        %575 = vmin.xlane.f32.xlu0 %v574
        %v576 = vpop.xlane.xlu0 %575
        %vm577 = vcmp.eq.f32.partialorder %v574, %v576
        %v578 = vsel %vm577, %v573, inf
        %579 = vmin.xlane.f32.xlu0 %v578
        %v580 = vpop.xlane.xlu0 %579
        %v581 = vcvt.f32.s32 %v580
        %v582 = vcvt.f32.s32 %v576
        %v583 = vshll.u32 %v582, 16
        %v584 = vadd.s32 %v583, %v581
        %v585 = vsel %vm414, %v485, 2147483647
        %v586 = vand.u32 %v585, 65535
        %v587 = vshra.s32 %v585, 16
        %v588 = vcvt.s32.f32 %v586
        %v589 = vcvt.s32.f32 %v587
        %590 = vmin.xlane.f32.xlu0 %v589
        %v591 = vpop.xlane.xlu0 %590
        %vm592 = vcmp.eq.f32.partialorder %v589, %v591
        %v593 = vsel %vm592, %v588, inf
        %594 = vmin.xlane.f32.xlu0 %v593
        %v595 = vpop.xlane.xlu0 %594
        %v596 = vcvt.f32.s32 %v595
        %v597 = vcvt.f32.s32 %v591
        %v598 = vshll.u32 %v597, 16
        %v599 = vadd.s32 %v598, %v596
        %v600 = vsel %vm414, %v486, 2147483647
        %v601 = vand.u32 %v600, 65535
        %v602 = vshra.s32 %v600, 16
        %v603 = vcvt.s32.f32 %v601
        %v604 = vcvt.s32.f32 %v602
        %605 = vmin.xlane.f32.xlu0 %v604
        %v606 = vpop.xlane.xlu0 %605
        %vm607 = vcmp.eq.f32.partialorder %v604, %v606
        %v608 = vsel %vm607, %v603, inf
        %609 = vmin.xlane.f32.xlu0 %v608
        %v610 = vpop.xlane.xlu0 %609
        %v611 = vcvt.f32.s32 %v610
        %v612 = vcvt.f32.s32 %v606
        %v613 = vshll.u32 %v612, 16
        %v614 = vadd.s32 %v613, %v611
        %v615 = vsel %vm414, %v487, 2147483647
        %v616 = vand.u32 %v615, 65535
        %v617 = vshra.s32 %v615, 16
        %v618 = vcvt.s32.f32 %v616
        %v619 = vcvt.s32.f32 %v617
        %620 = vmin.xlane.f32.xlu0 %v619
        %v621 = vpop.xlane.xlu0 %620
        %vm622 = vcmp.eq.f32.partialorder %v619, %v621
        %v623 = vsel %vm622, %v618, inf
        %624 = vmin.xlane.f32.xlu0 %v623
        %v625 = vpop.xlane.xlu0 %624
        %v626 = vcvt.f32.s32 %v625
        %v627 = vcvt.f32.s32 %v621
        %v628 = vshll.u32 %v627, 16
        %v629 = vadd.s32 %v628, %v626
        %v630 = vsel %vm414, %v488, 2147483647
        %v631 = vand.u32 %v630, 65535
        %v632 = vshra.s32 %v630, 16
        %v633 = vcvt.s32.f32 %v631
        %v634 = vcvt.s32.f32 %v632
        %635 = vmin.xlane.f32.xlu0 %v634
        %v636 = vpop.xlane.xlu0 %635
        %vm637 = vcmp.eq.f32.partialorder %v634, %v636
        %v638 = vsel %vm637, %v633, inf
        %639 = vmin.xlane.f32.xlu0 %v638
        %v640 = vpop.xlane.xlu0 %639
        %v641 = vcvt.f32.s32 %v640
        %v642 = vcvt.f32.s32 %v636
        %v643 = vshll.u32 %v642, 16
        %v644 = vadd.s32 %v643, %v641
        %v645 = vsel %vm414, %v489, 2147483647
        %v646 = vand.u32 %v645, 65535
        %v647 = vshra.s32 %v645, 16
        %v648 = vcvt.s32.f32 %v646
        %v649 = vcvt.s32.f32 %v647
        %650 = vmin.xlane.f32.xlu0 %v649
        %v651 = vpop.xlane.xlu0 %650
        %vm652 = vcmp.eq.f32.partialorder %v649, %v651
        %v653 = vsel %vm652, %v648, inf
        %654 = vmin.xlane.f32.xlu0 %v653
        %v655 = vpop.xlane.xlu0 %654
        %v656 = vcvt.f32.s32 %v655
        %v657 = vcvt.f32.s32 %v651
        %v658 = vshll.u32 %v657, 16
        %v659 = vadd.s32 %v658, %v656
        %v660 = vsel %vm414, %v490, 2147483647
        %v661 = vand.u32 %v660, 65535
        %v662 = vshra.s32 %v660, 16
        %v663 = vcvt.s32.f32 %v661
        %v664 = vcvt.s32.f32 %v662
        %665 = vmin.xlane.f32.xlu0 %v664
        %v666 = vpop.xlane.xlu0 %665
        %vm667 = vcmp.eq.f32.partialorder %v664, %v666
        %v668 = vsel %vm667, %v663, inf
        %669 = vmin.xlane.f32.xlu0 %v668
        %v670 = vpop.xlane.xlu0 %669
        %v671 = vcvt.f32.s32 %v670
        %v672 = vcvt.f32.s32 %v666
        %v673 = vshll.u32 %v672, 16
        %v674 = vadd.s32 %v673, %v671
        %v675 = vsel %vm414, %v491, 2147483647
        %v676 = vand.u32 %v675, 65535
        %v677 = vshra.s32 %v675, 16
        %v678 = vcvt.s32.f32 %v676
        %v679 = vcvt.s32.f32 %v677
        %680 = vmin.xlane.f32.xlu0 %v679
        %v681 = vpop.xlane.xlu0 %680
        %vm682 = vcmp.eq.f32.partialorder %v679, %v681
        %v683 = vsel %vm682, %v678, inf
        %684 = vmin.xlane.f32.xlu0 %v683
        %v685 = vpop.xlane.xlu0 %684
        %v686 = vcvt.f32.s32 %v685
        %v687 = vcvt.f32.s32 %v681
        %v688 = vshll.u32 %v687, 16
        %v689 = vadd.s32 %v688, %v686
        %v690 = vsel %vm414, %v492, 2147483647
        %v691 = vand.u32 %v690, 65535
        %v692 = vshra.s32 %v690, 16
        %v693 = vcvt.s32.f32 %v691
        %v694 = vcvt.s32.f32 %v692
        %695 = vmin.xlane.f32.xlu0 %v694
        %v696 = vpop.xlane.xlu0 %695
        %vm697 = vcmp.eq.f32.partialorder %v694, %v696
        %v698 = vsel %vm697, %v693, inf
        %699 = vmin.xlane.f32.xlu0 %v698
        %v700 = vpop.xlane.xlu0 %699
        %v701 = vcvt.f32.s32 %v700
        %v702 = vcvt.f32.s32 %v696
        %v703 = vshll.u32 %v702, 16
        %v704 = vadd.s32 %v703, %v701
        %v705 = vsel %vm414, %v493, 2147483647
        %v706 = vand.u32 %v705, 65535
        %v707 = vshra.s32 %v705, 16
        %v708 = vcvt.s32.f32 %v706
        %v709 = vcvt.s32.f32 %v707
        %710 = vmin.xlane.f32.xlu0 %v709
        %v711 = vpop.xlane.xlu0 %710
        %vm712 = vcmp.eq.f32.partialorder %v709, %v711
        %v713 = vsel %vm712, %v708, inf
        %714 = vmin.xlane.f32.xlu0 %v713
        %v715 = vpop.xlane.xlu0 %714
        %v716 = vcvt.f32.s32 %v715
        %v717 = vcvt.f32.s32 %v711
        %v718 = vshll.u32 %v717, 16
        %v719 = vadd.s32 %v718, %v716
        %v720 = vsel %vm414, %v494, 2147483647
        %v721 = vand.u32 %v720, 65535
        %v722 = vshra.s32 %v720, 16
        %v723 = vcvt.s32.f32 %v721
        %v724 = vcvt.s32.f32 %v722
        %725 = vmin.xlane.f32.xlu0 %v724
        %v726 = vpop.xlane.xlu0 %725
        %vm727 = vcmp.eq.f32.partialorder %v724, %v726
        %v728 = vsel %vm727, %v723, inf
        %729 = vmin.xlane.f32.xlu0 %v728
        %v730 = vpop.xlane.xlu0 %729
        %v731 = vcvt.f32.s32 %v730
        %v732 = vcvt.f32.s32 %v726
        %v733 = vshll.u32 %v732, 16
        %v734 = vadd.s32 %v733, %v731
        %vm735 = vcmp.eq.s32.totalorder %v262, %v509
        %vm736 = vcmp.eq.s32.totalorder %v262, %v524
        %vm737 = vcmp.eq.s32.totalorder %v262, %v539
        %vm738 = vcmp.eq.s32.totalorder %v262, %v554
        %vm739 = vcmp.eq.s32.totalorder %v262, %v569
        %vm740 = vcmp.eq.s32.totalorder %v262, %v584
        %vm741 = vcmp.eq.s32.totalorder %v262, %v599
        %vm742 = vcmp.eq.s32.totalorder %v262, %v614
        %vm743 = vcmp.eq.s32.totalorder %v262, %v629
        %vm744 = vcmp.eq.s32.totalorder %v262, %v644
        %vm745 = vcmp.eq.s32.totalorder %v262, %v659
        %vm746 = vcmp.eq.s32.totalorder %v262, %v674
        %vm747 = vcmp.eq.s32.totalorder %v262, %v689
        %vm748 = vcmp.eq.s32.totalorder %v262, %v704
        %vm749 = vcmp.eq.s32.totalorder %v262, %v719
        %vm750 = vcmp.eq.s32.totalorder %v262, %v734
        %v751 = vsel %vm735, 1, 0
        %v752 = vsel %vm736, 1, 0
        %v753 = vsel %vm737, 1, 0
        %v754 = vsel %vm738, 1, 0
        %v755 = vsel %vm739, 1, 0
        %v756 = vsel %vm740, 1, 0
        %v757 = vsel %vm741, 1, 0
        %v758 = vsel %vm742, 1, 0
        %v759 = vsel %vm743, 1, 0
        %v760 = vsel %vm744, 1, 0
        %v761 = vsel %vm745, 1, 0
        %v762 = vsel %vm746, 1, 0
        %v763 = vsel %vm747, 1, 0
        %v764 = vsel %vm748, 1, 0
        %v765 = vsel %vm749, 1, 0
        %v766 = vsel %vm750, 1, 0
        %v767 = vcvt.s32.f32 %v751
        %v768 = vcvt.s32.f32 %v752
        %v769 = vcvt.s32.f32 %v753
        %v770 = vcvt.s32.f32 %v754
        %v771 = vcvt.s32.f32 %v755
        %v772 = vcvt.s32.f32 %v756
        %v773 = vcvt.s32.f32 %v757
        %v774 = vcvt.s32.f32 %v758
        %v775 = vcvt.s32.f32 %v759
        %v776 = vcvt.s32.f32 %v760
        %v777 = vcvt.s32.f32 %v761
        %v778 = vcvt.s32.f32 %v762
        %v779 = vcvt.s32.f32 %v763
        %v780 = vcvt.s32.f32 %v764
        %v781 = vcvt.s32.f32 %v765
        %v782 = vcvt.s32.f32 %v766
        %v784 = vsel %vm414, %v767, 0
        %v787 = vsel %vm414, %v768, 0
        %v790 = vsel %vm414, %v769, 0
        %v793 = vsel %vm414, %v770, 0
        %v796 = vsel %vm414, %v771, 0
        %v799 = vsel %vm414, %v772, 0
        %v802 = vsel %vm414, %v773, 0
        %v805 = vsel %vm414, %v774, 0
        %v808 = vsel %vm414, %v775, 0
        %v811 = vsel %vm414, %v776, 0
        %v814 = vsel %vm414, %v777, 0
        %v817 = vsel %vm414, %v778, 0
        %v820 = vsel %vm414, %v779, 0
        %v823 = vsel %vm414, %v780, 0
        %v826 = vsel %vm414, %v781, 0
        %v829 = vsel %vm414, %v782, 0
        %831 = vmatprep.subr.mxu0 0.0
        %832 = vmatpush1.msra.mxu0 %v263
        %833 = vmatprep.subr.mxu0 0.0
        %834 = vmatpush1.msra.mxu0 %v264
        %835 = vmatprep.subr.mxu0 0.0
        %836 = vmatpush1.msra.mxu0 0.0
        %837 = vmatprep.subr.mxu0 0.0
        %838 = vmatpush1.msra.mxu0 0.0
        %839 = vmatprep.subr.mxu0 0.0
        %840 = vmatpush1.msra.mxu0 0.0
        %841 = vmatprep.subr.mxu0 0.0
        %842 = vmatpush1.msra.mxu0 0.0
        %843 = vmatprep.subr.mxu0 0.0
        %844 = vmatpush1.msra.mxu0 0.0
        %845 = vmatprep.subr.mxu0 0.0
        %846 = vmatpush1.msra.mxu0 0.0
        %847 = vmatprep.subr.mxu0 0.0
        %848 = vmatpush1.msra.mxu0 0.0
        %849 = vmatprep.subr.mxu0 0.0
        %850 = vmatpush1.msra.mxu0 0.0
        %851 = vmatprep.subr.mxu0 0.0
        %852 = vmatpush1.msra.mxu0 0.0
        %853 = vmatprep.subr.mxu0 0.0
        %854 = vmatpush1.msra.mxu0 0.0
        %855 = vmatprep.subr.mxu0 0.0
        %856 = vmatpush1.msra.mxu0 0.0
        %857 = vmatprep.subr.mxu0 0.0
        %858 = vmatpush1.msra.mxu0 0.0
        %859 = vmatprep.subr.mxu0 0.0
        %860 = vmatpush1.msra.mxu0 0.0
        %861 = vmatprep.subr.mxu0 0.0
        %862 = vmatpush1.msra.mxu0 0.0
        %863 = vmatprep.subr.mxu0 0.0
        %864 = vmatpush1.msra.mxu0 0.0
        %865 = vmatprep.subr.mxu0 0.0
        %866 = vmatpush1.msra.mxu0 0.0
        %867 = vmatprep.subr.mxu0 0.0
        %868 = vmatpush1.msra.mxu0 0.0
        %869 = vmatprep.subr.mxu0 0.0
        %870 = vmatpush1.msra.mxu0 0.0
        %871 = vmatprep.subr.mxu0 0.0
        %872 = vmatpush1.msra.mxu0 0.0
        %873 = vmatprep.subr.mxu0 0.0
        %874 = vmatpush1.msra.mxu0 0.0
        %875 = vmatprep.subr.mxu0 0.0
        %876 = vmatpush1.msra.mxu0 0.0
        %877 = vmatprep.subr.mxu0 0.0
        %878 = vmatpush1.msra.mxu0 0.0
        %879 = vmatprep.subr.mxu0 0.0
        %880 = vmatpush1.msra.mxu0 0.0
        %881 = vmatprep.subr.mxu0 0.0
        %882 = vmatpush1.msra.mxu0 0.0
        %883 = vmatprep.subr.mxu0 0.0
        %884 = vmatpush1.msra.mxu0 0.0
        %885 = vmatprep.subr.mxu0 0.0
        %886 = vmatpush1.msra.mxu0 0.0
        %887 = vmatprep.subr.mxu0 0.0
        %888 = vmatpush1.msra.mxu0 0.0
        %889 = vmatprep.subr.mxu0 0.0
        %890 = vmatpush1.msra.mxu0 0.0
        %891 = vmatprep.subr.mxu0 0.0
        %892 = vmatpush1.msra.mxu0 0.0
        %893 = vmatprep.subr.mxu0 0.0
        %894 = vmatpush1.msra.mxu0 0.0
        %895 = vmatprep.mubr.f32.mxu0 0.0
        %896 = vmatmul.mubr.f32.gmra.mrb[0].mxu0 %v784
        %v897 = vpop.f32.mrb[0].mxu0
        %v898 = vadd.f32 0.0, %v897
        %v899 = vpop.f32.mrb[0].mxu0
        %900 = vmatprep.mubr.f32.mxu0 0.0
        %901 = vmatmul.mubr.f32.gmra.mrb[0].mxu0 %v787
        %v902 = vpop.f32.mrb[0].mxu0
        %v903 = vadd.f32 0.0, %v902
        %v904 = vpop.f32.mrb[0].mxu0
        %905 = vmatprep.mubr.f32.mxu0 0.0
        %906 = vmatmul.mubr.f32.gmra.mrb[0].mxu0 %v790
        %v907 = vpop.f32.mrb[0].mxu0
        %v908 = vadd.f32 0.0, %v907
        %v909 = vpop.f32.mrb[0].mxu0
        %910 = vmatprep.mubr.f32.mxu0 0.0
        %911 = vmatmul.mubr.f32.gmra.mrb[0].mxu0 %v793
        %v912 = vpop.f32.mrb[0].mxu0
        %v913 = vadd.f32 0.0, %v912
        %v914 = vpop.f32.mrb[0].mxu0
        %915 = vmatprep.mubr.f32.mxu0 0.0
        %916 = vmatmul.mubr.f32.gmra.mrb[0].mxu0 %v796
        %v917 = vpop.f32.mrb[0].mxu0
        %v918 = vadd.f32 0.0, %v917
        %v919 = vpop.f32.mrb[0].mxu0
        %920 = vmatprep.mubr.f32.mxu0 0.0
        %921 = vmatmul.mubr.f32.gmra.mrb[0].mxu0 %v799
        %v922 = vpop.f32.mrb[0].mxu0
        %v923 = vadd.f32 0.0, %v922
        %v924 = vpop.f32.mrb[0].mxu0
        %925 = vmatprep.mubr.f32.mxu0 0.0
        %926 = vmatmul.mubr.f32.gmra.mrb[0].mxu0 %v802
        %v927 = vpop.f32.mrb[0].mxu0
        %v928 = vadd.f32 0.0, %v927
        %v929 = vpop.f32.mrb[0].mxu0
        %930 = vmatprep.mubr.f32.mxu0 0.0
        %931 = vmatmul.mubr.f32.gmra.mrb[0].mxu0 %v805
        %v932 = vpop.f32.mrb[0].mxu0
        %v933 = vadd.f32 0.0, %v932
        %v934 = vpop.f32.mrb[0].mxu0
        %935 = vmatprep.mubr.f32.mxu0 0.0
        %936 = vmatmul.mubr.f32.gmra.mrb[0].mxu0 %v808
        %v937 = vpop.f32.mrb[0].mxu0
        %v938 = vadd.f32 0.0, %v937
        %v939 = vpop.f32.mrb[0].mxu0
        %940 = vmatprep.mubr.f32.mxu0 0.0
        %941 = vmatmul.mubr.f32.gmra.mrb[0].mxu0 %v811
        %v942 = vpop.f32.mrb[0].mxu0
        %v943 = vadd.f32 0.0, %v942
        %v944 = vpop.f32.mrb[0].mxu0
        %945 = vmatprep.mubr.f32.mxu0 0.0
        %946 = vmatmul.mubr.f32.gmra.mrb[0].mxu0 %v814
        %v947 = vpop.f32.mrb[0].mxu0
        %v948 = vadd.f32 0.0, %v947
        %v949 = vpop.f32.mrb[0].mxu0
        %950 = vmatprep.mubr.f32.mxu0 0.0
        %951 = vmatmul.mubr.f32.gmra.mrb[0].mxu0 %v817
        %v952 = vpop.f32.mrb[0].mxu0
        %v953 = vadd.f32 0.0, %v952
        %v954 = vpop.f32.mrb[0].mxu0
        %955 = vmatprep.mubr.f32.mxu0 0.0
        %956 = vmatmul.mubr.f32.gmra.mrb[0].mxu0 %v820
        %v957 = vpop.f32.mrb[0].mxu0
        %v958 = vadd.f32 0.0, %v957
        %v959 = vpop.f32.mrb[0].mxu0
        %960 = vmatprep.mubr.f32.mxu0 0.0
        %961 = vmatmul.mubr.f32.gmra.mrb[0].mxu0 %v823
        %v962 = vpop.f32.mrb[0].mxu0
        %v963 = vadd.f32 0.0, %v962
        %v964 = vpop.f32.mrb[0].mxu0
        %965 = vmatprep.mubr.f32.mxu0 0.0
        %966 = vmatmul.mubr.f32.gmra.mrb[0].mxu0 %v826
        %v967 = vpop.f32.mrb[0].mxu0
        %v968 = vadd.f32 0.0, %v967
        %v969 = vpop.f32.mrb[0].mxu0
        %970 = vmatprep.mubr.f32.mxu0 0.0
        %971 = vmatmul.mubr.f32.gmra.mrb[0].mxu0 %v829
        %v972 = vpop.f32.mrb[0].mxu0
        %v973 = vadd.f32 0.0, %v972
        %v974 = vpop.f32.mrb[0].mxu0
        %975 = vdwg.mxu0
        %v976 = vsub.f32 %v244, %v898
        %v977 = vsub.f32 %v245, %v903
        %v978 = vsub.f32 %v246, %v908
        %v979 = vsub.f32 %v247, %v913
        %v980 = vsub.f32 %v248, %v918
        %v981 = vsub.f32 %v249, %v923
        %v982 = vsub.f32 %v250, %v928
        %v983 = vsub.f32 %v251, %v933
        %v984 = vsub.f32 %v252, %v938
        %v985 = vsub.f32 %v253, %v943
        %v986 = vsub.f32 %v254, %v948
        %v987 = vsub.f32 %v255, %v953
        %v988 = vsub.f32 %v256, %v958
        %v989 = vsub.f32 %v257, %v963
        %v990 = vsub.f32 %v258, %v968
        %v991 = vsub.f32 %v259, %v973
        %v992 = vadd.f32 %v898, 0.0
        %v993 = vadd.f32 %v903, 0.0
        %v994 = vadd.f32 %v908, 0.0
        %v995 = vadd.f32 %v913, 0.0
        %v996 = vadd.f32 %v918, 0.0
        %v997 = vadd.f32 %v923, 0.0
        %v998 = vadd.f32 %v928, 0.0
        %v999 = vadd.f32 %v933, 0.0
        %v1000 = vadd.f32 %v938, 0.0
        %v1001 = vadd.f32 %v943, 0.0
        %v1002 = vadd.f32 %v948, 0.0
        %v1003 = vadd.f32 %v953, 0.0
        %v1004 = vadd.f32 %v958, 0.0
        %v1005 = vadd.f32 %v963, 0.0
        %v1006 = vadd.f32 %v968, 0.0
        %v1007 = vadd.f32 %v973, 0.0
        %s1008 = scalar_lea.vmem [#allocation5], 16
        %v1009 = vld [vmem:[%s1008] sm:$0xff]
        %v1010 = vld [vmem:[%s1008 + $0x8] sm:$0xff]
        %v1011 = vlaneseq
        %v1012 = vshrl.u32 %v1011, 7
        %v1013 = vsub.s32 1, %v1012
        %v1014 = vrot.slane %v260, %v1013
        %1015 = vmatprep.subr.mxu0 0.0
        %1016 = vmatpush1.xpose.msra.mxu0 %v1009
        %1017 = vmatprep.subr.mxu0 0.0
        %1018 = vmatpush1.xpose.msra.mxu0 %v1010
        %1019 = vmatprep.subr.mxu0 0.0
        %1020 = vmatpush1.xpose.msra.mxu0 0.0
        %1021 = vmatprep.subr.mxu0 0.0
        %1022 = vmatpush1.xpose.msra.mxu0 0.0
        %1023 = vmatprep.subr.mxu0 0.0
        %1024 = vmatpush1.xpose.msra.mxu0 0.0
        %1025 = vmatprep.subr.mxu0 0.0
        %1026 = vmatpush1.xpose.msra.mxu0 0.0
        %1027 = vmatprep.subr.mxu0 0.0
        %1028 = vmatpush1.xpose.msra.mxu0 0.0
        %1029 = vmatprep.subr.mxu0 0.0
        %1030 = vmatpush1.xpose.msra.mxu0 0.0
        %1031 = vmatprep.subr.mxu0 0.0
        %1032 = vmatpush1.xpose.msra.mxu0 0.0
        %1033 = vmatprep.subr.mxu0 0.0
        %1034 = vmatpush1.xpose.msra.mxu0 0.0
        %1035 = vmatprep.subr.mxu0 0.0
        %1036 = vmatpush1.xpose.msra.mxu0 0.0
        %1037 = vmatprep.subr.mxu0 0.0
        %1038 = vmatpush1.xpose.msra.mxu0 0.0
        %1039 = vmatprep.subr.mxu0 0.0
        %1040 = vmatpush1.xpose.msra.mxu0 0.0
        %1041 = vmatprep.subr.mxu0 0.0
        %1042 = vmatpush1.xpose.msra.mxu0 0.0
        %1043 = vmatprep.subr.mxu0 0.0
        %1044 = vmatpush1.xpose.msra.mxu0 0.0
        %1045 = vmatprep.subr.mxu0 0.0
        %1046 = vmatpush1.xpose.msra.mxu0 0.0
        %1047 = vmatprep.subr.mxu0 0.0
        %1048 = vmatpush1.xpose.msra.mxu0 0.0
        %1049 = vmatprep.subr.mxu0 0.0
        %1050 = vmatpush1.xpose.msra.mxu0 0.0
        %1051 = vmatprep.subr.mxu0 0.0
        %1052 = vmatpush1.xpose.msra.mxu0 0.0
        %1053 = vmatprep.subr.mxu0 0.0
        %1054 = vmatpush1.xpose.msra.mxu0 0.0
        %1055 = vmatprep.subr.mxu0 0.0
        %1056 = vmatpush1.xpose.msra.mxu0 0.0
        %1057 = vmatprep.subr.mxu0 0.0
        %1058 = vmatpush1.xpose.msra.mxu0 0.0
        %1059 = vmatprep.subr.mxu0 0.0
        %1060 = vmatpush1.xpose.msra.mxu0 0.0
        %1061 = vmatprep.subr.mxu0 0.0
        %1062 = vmatpush1.xpose.msra.mxu0 0.0
        %1063 = vmatprep.subr.mxu0 0.0
        %1064 = vmatpush1.xpose.msra.mxu0 0.0
        %1065 = vmatprep.subr.mxu0 0.0
        %1066 = vmatpush1.xpose.msra.mxu0 0.0
        %1067 = vmatprep.subr.mxu0 0.0
        %1068 = vmatpush1.xpose.msra.mxu0 0.0
        %1069 = vmatprep.subr.mxu0 0.0
        %1070 = vmatpush1.xpose.msra.mxu0 0.0
        %1071 = vmatprep.subr.mxu0 0.0
        %1072 = vmatpush1.xpose.msra.mxu0 0.0
        %1073 = vmatprep.subr.mxu0 0.0
        %1074 = vmatpush1.xpose.msra.mxu0 0.0
        %1075 = vmatprep.subr.mxu0 0.0
        %1076 = vmatpush1.xpose.msra.mxu0 0.0
        %1077 = vmatprep.subr.mxu0 0.0
        %1078 = vmatpush1.xpose.msra.mxu0 0.0
        %1079 = vmatprep.mubr.f32.mxu0 0.0
        %1080 = vmatmul.mubr.f32.gmra.mrb[0].mxu0 %v976
        %v1081 = vpop.f32.mrb[0].mxu0
        %v1082 = vadd.f32 %v1014, %v1081
        %v1083 = vpop.f32.mrb[0].mxu0
        %1084 = vmatprep.mubr.f32.mxu0 0.0
        %1085 = vmatmul.mubr.f32.gmra.mrb[0].mxu0 %v977
        %v1086 = vpop.f32.mrb[0].mxu0
        %v1087 = vadd.f32 %v1014, %v1086
        %v1088 = vpop.f32.mrb[0].mxu0
        %1089 = vmatprep.mubr.f32.mxu0 0.0
        %1090 = vmatmul.mubr.f32.gmra.mrb[0].mxu0 %v978
        %v1091 = vpop.f32.mrb[0].mxu0
        %v1092 = vadd.f32 %v1014, %v1091
        %v1093 = vpop.f32.mrb[0].mxu0
        %1094 = vmatprep.mubr.f32.mxu0 0.0
        %1095 = vmatmul.mubr.f32.gmra.mrb[0].mxu0 %v979
        %v1096 = vpop.f32.mrb[0].mxu0
        %v1097 = vadd.f32 %v1014, %v1096
        %v1098 = vpop.f32.mrb[0].mxu0
        %1099 = vmatprep.mubr.f32.mxu0 0.0
        %1100 = vmatmul.mubr.f32.gmra.mrb[0].mxu0 %v980
        %v1101 = vpop.f32.mrb[0].mxu0
        %v1102 = vadd.f32 %v1014, %v1101
        %v1103 = vpop.f32.mrb[0].mxu0
        %1104 = vmatprep.mubr.f32.mxu0 0.0
        %1105 = vmatmul.mubr.f32.gmra.mrb[0].mxu0 %v981
        %v1106 = vpop.f32.mrb[0].mxu0
        %v1107 = vadd.f32 %v1014, %v1106
        %v1108 = vpop.f32.mrb[0].mxu0
        %1109 = vmatprep.mubr.f32.mxu0 0.0
        %1110 = vmatmul.mubr.f32.gmra.mrb[0].mxu0 %v982
        %v1111 = vpop.f32.mrb[0].mxu0
        %v1112 = vadd.f32 %v1014, %v1111
        %v1113 = vpop.f32.mrb[0].mxu0
        %1114 = vmatprep.mubr.f32.mxu0 0.0
        %1115 = vmatmul.mubr.f32.gmra.mrb[0].mxu0 %v983
        %v1116 = vpop.f32.mrb[0].mxu0
        %v1117 = vadd.f32 %v1014, %v1116
        %v1118 = vpop.f32.mrb[0].mxu0
        %1119 = vmatprep.mubr.f32.mxu0 0.0
        %1120 = vmatmul.mubr.f32.gmra.mrb[0].mxu0 %v984
        %v1121 = vpop.f32.mrb[0].mxu0
        %v1122 = vadd.f32 %v1014, %v1121
        %v1123 = vpop.f32.mrb[0].mxu0
        %1124 = vmatprep.mubr.f32.mxu0 0.0
        %1125 = vmatmul.mubr.f32.gmra.mrb[0].mxu0 %v985
        %v1126 = vpop.f32.mrb[0].mxu0
        %v1127 = vadd.f32 %v1014, %v1126
        %v1128 = vpop.f32.mrb[0].mxu0
        %1129 = vmatprep.mubr.f32.mxu0 0.0
        %1130 = vmatmul.mubr.f32.gmra.mrb[0].mxu0 %v986
        %v1131 = vpop.f32.mrb[0].mxu0
        %v1132 = vadd.f32 %v1014, %v1131
        %v1133 = vpop.f32.mrb[0].mxu0
        %1134 = vmatprep.mubr.f32.mxu0 0.0
        %1135 = vmatmul.mubr.f32.gmra.mrb[0].mxu0 %v987
        %v1136 = vpop.f32.mrb[0].mxu0
        %v1137 = vadd.f32 %v1014, %v1136
        %v1138 = vpop.f32.mrb[0].mxu0
        %1139 = vmatprep.mubr.f32.mxu0 0.0
        %1140 = vmatmul.mubr.f32.gmra.mrb[0].mxu0 %v988
        %v1141 = vpop.f32.mrb[0].mxu0
        %v1142 = vadd.f32 %v1014, %v1141
        %v1143 = vpop.f32.mrb[0].mxu0
        %1144 = vmatprep.mubr.f32.mxu0 0.0
        %1145 = vmatmul.mubr.f32.gmra.mrb[0].mxu0 %v989
        %v1146 = vpop.f32.mrb[0].mxu0
        %v1147 = vadd.f32 %v1014, %v1146
        %v1148 = vpop.f32.mrb[0].mxu0
        %1149 = vmatprep.mubr.f32.mxu0 0.0
        %1150 = vmatmul.mubr.f32.gmra.mrb[0].mxu0 %v990
        %v1151 = vpop.f32.mrb[0].mxu0
        %v1152 = vadd.f32 %v1014, %v1151
        %v1153 = vpop.f32.mrb[0].mxu0
        %1154 = vmatprep.mubr.f32.mxu0 0.0
        %1155 = vmatmul.mubr.f32.gmra.mrb[0].mxu0 %v991
        %v1156 = vpop.f32.mrb[0].mxu0
        %v1157 = vadd.f32 %v1014, %v1156
        %v1158 = vpop.f32.mrb[0].mxu0
        %1159 = vdwg.mxu0
        %v1160 = vsel %vm414, %v1082, -inf
        %1161 = vmax.xlane.f32.xlu0 %v1160
        %v1162 = vpop.xlane.xlu0 %1161
        %v1163 = vsel %vm414, %v1087, -inf
        %1164 = vmax.xlane.f32.xlu0 %v1163
        %v1165 = vpop.xlane.xlu0 %1164
        %v1166 = vsel %vm414, %v1092, -inf
        %1167 = vmax.xlane.f32.xlu0 %v1166
        %v1168 = vpop.xlane.xlu0 %1167
        %v1169 = vsel %vm414, %v1097, -inf
        %1170 = vmax.xlane.f32.xlu0 %v1169
        %v1171 = vpop.xlane.xlu0 %1170
        %v1172 = vsel %vm414, %v1102, -inf
        %1173 = vmax.xlane.f32.xlu0 %v1172
        %v1174 = vpop.xlane.xlu0 %1173
        %v1175 = vsel %vm414, %v1107, -inf
        %1176 = vmax.xlane.f32.xlu0 %v1175
        %v1177 = vpop.xlane.xlu0 %1176
        %v1178 = vsel %vm414, %v1112, -inf
        %1179 = vmax.xlane.f32.xlu0 %v1178
        %v1180 = vpop.xlane.xlu0 %1179
        %v1181 = vsel %vm414, %v1117, -inf
        %1182 = vmax.xlane.f32.xlu0 %v1181
        %v1183 = vpop.xlane.xlu0 %1182
        %v1184 = vsel %vm414, %v1122, -inf
        %1185 = vmax.xlane.f32.xlu0 %v1184
        %v1186 = vpop.xlane.xlu0 %1185
        %v1187 = vsel %vm414, %v1127, -inf
        %1188 = vmax.xlane.f32.xlu0 %v1187
        %v1189 = vpop.xlane.xlu0 %1188
        %v1190 = vsel %vm414, %v1132, -inf
        %1191 = vmax.xlane.f32.xlu0 %v1190
        %v1192 = vpop.xlane.xlu0 %1191
        %v1193 = vsel %vm414, %v1137, -inf
        %1194 = vmax.xlane.f32.xlu0 %v1193
        %v1195 = vpop.xlane.xlu0 %1194
        %v1196 = vsel %vm414, %v1142, -inf
        %1197 = vmax.xlane.f32.xlu0 %v1196
        %v1198 = vpop.xlane.xlu0 %1197
        %v1199 = vsel %vm414, %v1147, -inf
        %1200 = vmax.xlane.f32.xlu0 %v1199
        %v1201 = vpop.xlane.xlu0 %1200
        %v1202 = vsel %vm414, %v1152, -inf
        %1203 = vmax.xlane.f32.xlu0 %v1202
        %v1204 = vpop.xlane.xlu0 %1203
        %v1205 = vsel %vm414, %v1157, -inf
        %1206 = vmax.xlane.f32.xlu0 %v1205
        %v1207 = vpop.xlane.xlu0 %1206
        %vm1208 = vcmp.eq.f32.partialorder %v1082, %v1162
        %vm1209 = vcmp.eq.f32.partialorder %v1087, %v1165
        %vm1210 = vcmp.eq.f32.partialorder %v1092, %v1168
        %vm1211 = vcmp.eq.f32.partialorder %v1097, %v1171
        %vm1212 = vcmp.eq.f32.partialorder %v1102, %v1174
        %vm1213 = vcmp.eq.f32.partialorder %v1107, %v1177
        %vm1214 = vcmp.eq.f32.partialorder %v1112, %v1180
        %vm1215 = vcmp.eq.f32.partialorder %v1117, %v1183
        %vm1216 = vcmp.eq.f32.partialorder %v1122, %v1186
        %vm1217 = vcmp.eq.f32.partialorder %v1127, %v1189
        %vm1218 = vcmp.eq.f32.partialorder %v1132, %v1192
        %vm1219 = vcmp.eq.f32.partialorder %v1137, %v1195
        %vm1220 = vcmp.eq.f32.partialorder %v1142, %v1198
        %vm1221 = vcmp.eq.f32.partialorder %v1147, %v1201
        %vm1222 = vcmp.eq.f32.partialorder %v1152, %v1204
        %vm1223 = vcmp.eq.f32.partialorder %v1157, %v1207
        %v1224 = vsel %vm1208, %v262, 16
        %v1225 = vsel %vm1209, %v262, 16
        %v1226 = vsel %vm1210, %v262, 16
        %v1227 = vsel %vm1211, %v262, 16
        %v1228 = vsel %vm1212, %v262, 16
        %v1229 = vsel %vm1213, %v262, 16
        %v1230 = vsel %vm1214, %v262, 16
        %v1231 = vsel %vm1215, %v262, 16
        %v1232 = vsel %vm1216, %v262, 16
        %v1233 = vsel %vm1217, %v262, 16
        %v1234 = vsel %vm1218, %v262, 16
        %v1235 = vsel %vm1219, %v262, 16
        %v1236 = vsel %vm1220, %v262, 16
        %v1237 = vsel %vm1221, %v262, 16
        %v1238 = vsel %vm1222, %v262, 16
        %v1239 = vsel %vm1223, %v262, 16
        %v1240 = vsel %vm414, %v1224, 2147483647
        %v1241 = vand.u32 %v1240, 65535
        %v1242 = vshra.s32 %v1240, 16
        %v1243 = vcvt.s32.f32 %v1241
        %v1244 = vcvt.s32.f32 %v1242
        %1245 = vmin.xlane.f32.xlu0 %v1244
        %v1246 = vpop.xlane.xlu0 %1245
        %vm1247 = vcmp.eq.f32.partialorder %v1244, %v1246
        %v1248 = vsel %vm1247, %v1243, inf
        %1249 = vmin.xlane.f32.xlu0 %v1248
        %v1250 = vpop.xlane.xlu0 %1249
        %v1251 = vcvt.f32.s32 %v1250
        %v1252 = vcvt.f32.s32 %v1246
        %v1253 = vshll.u32 %v1252, 16
        %v1254 = vadd.s32 %v1253, %v1251
        %v1255 = vsel %vm414, %v1225, 2147483647
        %v1256 = vand.u32 %v1255, 65535
        %v1257 = vshra.s32 %v1255, 16
        %v1258 = vcvt.s32.f32 %v1256
        %v1259 = vcvt.s32.f32 %v1257
        %1260 = vmin.xlane.f32.xlu0 %v1259
        %v1261 = vpop.xlane.xlu0 %1260
        %vm1262 = vcmp.eq.f32.partialorder %v1259, %v1261
        %v1263 = vsel %vm1262, %v1258, inf
        %1264 = vmin.xlane.f32.xlu0 %v1263
        %v1265 = vpop.xlane.xlu0 %1264
        %v1266 = vcvt.f32.s32 %v1265
        %v1267 = vcvt.f32.s32 %v1261
        %v1268 = vshll.u32 %v1267, 16
        %v1269 = vadd.s32 %v1268, %v1266
        %v1270 = vsel %vm414, %v1226, 2147483647
        %v1271 = vand.u32 %v1270, 65535
        %v1272 = vshra.s32 %v1270, 16
        %v1273 = vcvt.s32.f32 %v1271
        %v1274 = vcvt.s32.f32 %v1272
        %1275 = vmin.xlane.f32.xlu0 %v1274
        %v1276 = vpop.xlane.xlu0 %1275
        %vm1277 = vcmp.eq.f32.partialorder %v1274, %v1276
        %v1278 = vsel %vm1277, %v1273, inf
        %1279 = vmin.xlane.f32.xlu0 %v1278
        %v1280 = vpop.xlane.xlu0 %1279
        %v1281 = vcvt.f32.s32 %v1280
        %v1282 = vcvt.f32.s32 %v1276
        %v1283 = vshll.u32 %v1282, 16
        %v1284 = vadd.s32 %v1283, %v1281
        %v1285 = vsel %vm414, %v1227, 2147483647
        %v1286 = vand.u32 %v1285, 65535
        %v1287 = vshra.s32 %v1285, 16
        %v1288 = vcvt.s32.f32 %v1286
        %v1289 = vcvt.s32.f32 %v1287
        %1290 = vmin.xlane.f32.xlu0 %v1289
        %v1291 = vpop.xlane.xlu0 %1290
        %vm1292 = vcmp.eq.f32.partialorder %v1289, %v1291
        %v1293 = vsel %vm1292, %v1288, inf
        %1294 = vmin.xlane.f32.xlu0 %v1293
        %v1295 = vpop.xlane.xlu0 %1294
        %v1296 = vcvt.f32.s32 %v1295
        %v1297 = vcvt.f32.s32 %v1291
        %v1298 = vshll.u32 %v1297, 16
        %v1299 = vadd.s32 %v1298, %v1296
        %v1300 = vsel %vm414, %v1228, 2147483647
        %v1301 = vand.u32 %v1300, 65535
        %v1302 = vshra.s32 %v1300, 16
        %v1303 = vcvt.s32.f32 %v1301
        %v1304 = vcvt.s32.f32 %v1302
        %1305 = vmin.xlane.f32.xlu0 %v1304
        %v1306 = vpop.xlane.xlu0 %1305
        %vm1307 = vcmp.eq.f32.partialorder %v1304, %v1306
        %v1308 = vsel %vm1307, %v1303, inf
        %1309 = vmin.xlane.f32.xlu0 %v1308
        %v1310 = vpop.xlane.xlu0 %1309
        %v1311 = vcvt.f32.s32 %v1310
        %v1312 = vcvt.f32.s32 %v1306
        %v1313 = vshll.u32 %v1312, 16
        %v1314 = vadd.s32 %v1313, %v1311
        %v1315 = vsel %vm414, %v1229, 2147483647
        %v1316 = vand.u32 %v1315, 65535
        %v1317 = vshra.s32 %v1315, 16
        %v1318 = vcvt.s32.f32 %v1316
        %v1319 = vcvt.s32.f32 %v1317
        %1320 = vmin.xlane.f32.xlu0 %v1319
        %v1321 = vpop.xlane.xlu0 %1320
        %vm1322 = vcmp.eq.f32.partialorder %v1319, %v1321
        %v1323 = vsel %vm1322, %v1318, inf
        %1324 = vmin.xlane.f32.xlu0 %v1323
        %v1325 = vpop.xlane.xlu0 %1324
        %v1326 = vcvt.f32.s32 %v1325
        %v1327 = vcvt.f32.s32 %v1321
        %v1328 = vshll.u32 %v1327, 16
        %v1329 = vadd.s32 %v1328, %v1326
        %v1330 = vsel %vm414, %v1230, 2147483647
        %v1331 = vand.u32 %v1330, 65535
        %v1332 = vshra.s32 %v1330, 16
        %v1333 = vcvt.s32.f32 %v1331
        %v1334 = vcvt.s32.f32 %v1332
        %1335 = vmin.xlane.f32.xlu0 %v1334
        %v1336 = vpop.xlane.xlu0 %1335
        %vm1337 = vcmp.eq.f32.partialorder %v1334, %v1336
        %v1338 = vsel %vm1337, %v1333, inf
        %1339 = vmin.xlane.f32.xlu0 %v1338
        %v1340 = vpop.xlane.xlu0 %1339
        %v1341 = vcvt.f32.s32 %v1340
        %v1342 = vcvt.f32.s32 %v1336
        %v1343 = vshll.u32 %v1342, 16
        %v1344 = vadd.s32 %v1343, %v1341
        %v1345 = vsel %vm414, %v1231, 2147483647
        %v1346 = vand.u32 %v1345, 65535
        %v1347 = vshra.s32 %v1345, 16
        %v1348 = vcvt.s32.f32 %v1346
        %v1349 = vcvt.s32.f32 %v1347
        %1350 = vmin.xlane.f32.xlu0 %v1349
        %v1351 = vpop.xlane.xlu0 %1350
        %vm1352 = vcmp.eq.f32.partialorder %v1349, %v1351
        %v1353 = vsel %vm1352, %v1348, inf
        %1354 = vmin.xlane.f32.xlu0 %v1353
        %v1355 = vpop.xlane.xlu0 %1354
        %v1356 = vcvt.f32.s32 %v1355
        %v1357 = vcvt.f32.s32 %v1351
        %v1358 = vshll.u32 %v1357, 16
        %v1359 = vadd.s32 %v1358, %v1356
        %v1360 = vsel %vm414, %v1232, 2147483647
        %v1361 = vand.u32 %v1360, 65535
        %v1362 = vshra.s32 %v1360, 16
        %v1363 = vcvt.s32.f32 %v1361
        %v1364 = vcvt.s32.f32 %v1362
        %1365 = vmin.xlane.f32.xlu0 %v1364
        %v1366 = vpop.xlane.xlu0 %1365
        %vm1367 = vcmp.eq.f32.partialorder %v1364, %v1366
        %v1368 = vsel %vm1367, %v1363, inf
        %1369 = vmin.xlane.f32.xlu0 %v1368
        %v1370 = vpop.xlane.xlu0 %1369
        %v1371 = vcvt.f32.s32 %v1370
        %v1372 = vcvt.f32.s32 %v1366
        %v1373 = vshll.u32 %v1372, 16
        %v1374 = vadd.s32 %v1373, %v1371
        %v1375 = vsel %vm414, %v1233, 2147483647
        %v1376 = vand.u32 %v1375, 65535
        %v1377 = vshra.s32 %v1375, 16
        %v1378 = vcvt.s32.f32 %v1376
        %v1379 = vcvt.s32.f32 %v1377
        %1380 = vmin.xlane.f32.xlu0 %v1379
        %v1381 = vpop.xlane.xlu0 %1380
        %vm1382 = vcmp.eq.f32.partialorder %v1379, %v1381
        %v1383 = vsel %vm1382, %v1378, inf
        %1384 = vmin.xlane.f32.xlu0 %v1383
        %v1385 = vpop.xlane.xlu0 %1384
        %v1386 = vcvt.f32.s32 %v1385
        %v1387 = vcvt.f32.s32 %v1381
        %v1388 = vshll.u32 %v1387, 16
        %v1389 = vadd.s32 %v1388, %v1386
        %v1390 = vsel %vm414, %v1234, 2147483647
        %v1391 = vand.u32 %v1390, 65535
        %v1392 = vshra.s32 %v1390, 16
        %v1393 = vcvt.s32.f32 %v1391
        %v1394 = vcvt.s32.f32 %v1392
        %1395 = vmin.xlane.f32.xlu0 %v1394
        %v1396 = vpop.xlane.xlu0 %1395
        %vm1397 = vcmp.eq.f32.partialorder %v1394, %v1396
        %v1398 = vsel %vm1397, %v1393, inf
        %1399 = vmin.xlane.f32.xlu0 %v1398
        %v1400 = vpop.xlane.xlu0 %1399
        %v1401 = vcvt.f32.s32 %v1400
        %v1402 = vcvt.f32.s32 %v1396
        %v1403 = vshll.u32 %v1402, 16
        %v1404 = vadd.s32 %v1403, %v1401
        %v1405 = vsel %vm414, %v1235, 2147483647
        %v1406 = vand.u32 %v1405, 65535
        %v1407 = vshra.s32 %v1405, 16
        %v1408 = vcvt.s32.f32 %v1406
        %v1409 = vcvt.s32.f32 %v1407
        %1410 = vmin.xlane.f32.xlu0 %v1409
        %v1411 = vpop.xlane.xlu0 %1410
        %vm1412 = vcmp.eq.f32.partialorder %v1409, %v1411
        %v1413 = vsel %vm1412, %v1408, inf
        %1414 = vmin.xlane.f32.xlu0 %v1413
        %v1415 = vpop.xlane.xlu0 %1414
        %v1416 = vcvt.f32.s32 %v1415
        %v1417 = vcvt.f32.s32 %v1411
        %v1418 = vshll.u32 %v1417, 16
        %v1419 = vadd.s32 %v1418, %v1416
        %v1420 = vsel %vm414, %v1236, 2147483647
        %v1421 = vand.u32 %v1420, 65535
        %v1422 = vshra.s32 %v1420, 16
        %v1423 = vcvt.s32.f32 %v1421
        %v1424 = vcvt.s32.f32 %v1422
        %1425 = vmin.xlane.f32.xlu0 %v1424
        %v1426 = vpop.xlane.xlu0 %1425
        %vm1427 = vcmp.eq.f32.partialorder %v1424, %v1426
        %v1428 = vsel %vm1427, %v1423, inf
        %1429 = vmin.xlane.f32.xlu0 %v1428
        %v1430 = vpop.xlane.xlu0 %1429
        %v1431 = vcvt.f32.s32 %v1430
        %v1432 = vcvt.f32.s32 %v1426
        %v1433 = vshll.u32 %v1432, 16
        %v1434 = vadd.s32 %v1433, %v1431
        %v1435 = vsel %vm414, %v1237, 2147483647
        %v1436 = vand.u32 %v1435, 65535
        %v1437 = vshra.s32 %v1435, 16
        %v1438 = vcvt.s32.f32 %v1436
        %v1439 = vcvt.s32.f32 %v1437
        %1440 = vmin.xlane.f32.xlu0 %v1439
        %v1441 = vpop.xlane.xlu0 %1440
        %vm1442 = vcmp.eq.f32.partialorder %v1439, %v1441
        %v1443 = vsel %vm1442, %v1438, inf
        %1444 = vmin.xlane.f32.xlu0 %v1443
        %v1445 = vpop.xlane.xlu0 %1444
        %v1446 = vcvt.f32.s32 %v1445
        %v1447 = vcvt.f32.s32 %v1441
        %v1448 = vshll.u32 %v1447, 16
        %v1449 = vadd.s32 %v1448, %v1446
        %v1450 = vsel %vm414, %v1238, 2147483647
        %v1451 = vand.u32 %v1450, 65535
        %v1452 = vshra.s32 %v1450, 16
        %v1453 = vcvt.s32.f32 %v1451
        %v1454 = vcvt.s32.f32 %v1452
        %1455 = vmin.xlane.f32.xlu0 %v1454
        %v1456 = vpop.xlane.xlu0 %1455
        %vm1457 = vcmp.eq.f32.partialorder %v1454, %v1456
        %v1458 = vsel %vm1457, %v1453, inf
        %1459 = vmin.xlane.f32.xlu0 %v1458
        %v1460 = vpop.xlane.xlu0 %1459
        %v1461 = vcvt.f32.s32 %v1460
        %v1462 = vcvt.f32.s32 %v1456
        %v1463 = vshll.u32 %v1462, 16
        %v1464 = vadd.s32 %v1463, %v1461
        %v1465 = vsel %vm414, %v1239, 2147483647
        %v1466 = vand.u32 %v1465, 65535
        %v1467 = vshra.s32 %v1465, 16
        %v1468 = vcvt.s32.f32 %v1466
        %v1469 = vcvt.s32.f32 %v1467
        %1470 = vmin.xlane.f32.xlu0 %v1469
        %v1471 = vpop.xlane.xlu0 %1470
        %vm1472 = vcmp.eq.f32.partialorder %v1469, %v1471
        %v1473 = vsel %vm1472, %v1468, inf
        %1474 = vmin.xlane.f32.xlu0 %v1473
        %v1475 = vpop.xlane.xlu0 %1474
        %v1476 = vcvt.f32.s32 %v1475
        %v1477 = vcvt.f32.s32 %v1471
        %v1478 = vshll.u32 %v1477, 16
        %v1479 = vadd.s32 %v1478, %v1476
        %vm1480 = vcmp.eq.s32.totalorder %v262, %v1254
        %vm1481 = vcmp.eq.s32.totalorder %v262, %v1269
        %vm1482 = vcmp.eq.s32.totalorder %v262, %v1284
        %vm1483 = vcmp.eq.s32.totalorder %v262, %v1299
        %vm1484 = vcmp.eq.s32.totalorder %v262, %v1314
        %vm1485 = vcmp.eq.s32.totalorder %v262, %v1329
        %vm1486 = vcmp.eq.s32.totalorder %v262, %v1344
        %vm1487 = vcmp.eq.s32.totalorder %v262, %v1359
        %vm1488 = vcmp.eq.s32.totalorder %v262, %v1374
        %vm1489 = vcmp.eq.s32.totalorder %v262, %v1389
        %vm1490 = vcmp.eq.s32.totalorder %v262, %v1404
        %vm1491 = vcmp.eq.s32.totalorder %v262, %v1419
        %vm1492 = vcmp.eq.s32.totalorder %v262, %v1434
        %vm1493 = vcmp.eq.s32.totalorder %v262, %v1449
        %vm1494 = vcmp.eq.s32.totalorder %v262, %v1464
        %vm1495 = vcmp.eq.s32.totalorder %v262, %v1479
        %v1496 = vsel %vm1480, 1, 0
        %v1497 = vsel %vm1481, 1, 0
        %v1498 = vsel %vm1482, 1, 0
        %v1499 = vsel %vm1483, 1, 0
        %v1500 = vsel %vm1484, 1, 0
        %v1501 = vsel %vm1485, 1, 0
        %v1502 = vsel %vm1486, 1, 0
        %v1503 = vsel %vm1487, 1, 0
        %v1504 = vsel %vm1488, 1, 0
        %v1505 = vsel %vm1489, 1, 0
        %v1506 = vsel %vm1490, 1, 0
        %v1507 = vsel %vm1491, 1, 0
        %v1508 = vsel %vm1492, 1, 0
        %v1509 = vsel %vm1493, 1, 0
        %v1510 = vsel %vm1494, 1, 0
        %v1511 = vsel %vm1495, 1, 0
        %v1512 = vcvt.s32.f32 %v1496
        %v1513 = vcvt.s32.f32 %v1497
        %v1514 = vcvt.s32.f32 %v1498
        %v1515 = vcvt.s32.f32 %v1499
        %v1516 = vcvt.s32.f32 %v1500
        %v1517 = vcvt.s32.f32 %v1501
        %v1518 = vcvt.s32.f32 %v1502
        %v1519 = vcvt.s32.f32 %v1503
        %v1520 = vcvt.s32.f32 %v1504
        %v1521 = vcvt.s32.f32 %v1505
        %v1522 = vcvt.s32.f32 %v1506
        %v1523 = vcvt.s32.f32 %v1507
        %v1524 = vcvt.s32.f32 %v1508
        %v1525 = vcvt.s32.f32 %v1509
        %v1526 = vcvt.s32.f32 %v1510
        %v1527 = vcvt.s32.f32 %v1511
        %v1529 = vsel %vm414, %v1512, 0
        %v1532 = vsel %vm414, %v1513, 0
        %v1535 = vsel %vm414, %v1514, 0
        %v1538 = vsel %vm414, %v1515, 0
        %v1541 = vsel %vm414, %v1516, 0
        %v1544 = vsel %vm414, %v1517, 0
        %v1547 = vsel %vm414, %v1518, 0
        %v1550 = vsel %vm414, %v1519, 0
        %v1553 = vsel %vm414, %v1520, 0
        %v1556 = vsel %vm414, %v1521, 0
        %v1559 = vsel %vm414, %v1522, 0
        %v1562 = vsel %vm414, %v1523, 0
        %v1565 = vsel %vm414, %v1524, 0
        %v1568 = vsel %vm414, %v1525, 0
        %v1571 = vsel %vm414, %v1526, 0
        %v1574 = vsel %vm414, %v1527, 0
        %1576 = vmatprep.subr.mxu0 0.0
        %1577 = vmatpush1.msra.mxu0 %v1009
        %1578 = vmatprep.subr.mxu0 0.0
        %1579 = vmatpush1.msra.mxu0 %v1010
        %1580 = vmatprep.subr.mxu0 0.0
        %1581 = vmatpush1.msra.mxu0 0.0
        %1582 = vmatprep.subr.mxu0 0.0
        %1583 = vmatpush1.msra.mxu0 0.0
        %1584 = vmatprep.subr.mxu0 0.0
        %1585 = vmatpush1.msra.mxu0 0.0
        %1586 = vmatprep.subr.mxu0 0.0
        %1587 = vmatpush1.msra.mxu0 0.0
        %1588 = vmatprep.subr.mxu0 0.0
        %1589 = vmatpush1.msra.mxu0 0.0
        %1590 = vmatprep.subr.mxu0 0.0
        %1591 = vmatpush1.msra.mxu0 0.0
        %1592 = vmatprep.subr.mxu0 0.0
        %1593 = vmatpush1.msra.mxu0 0.0
        %1594 = vmatprep.subr.mxu0 0.0
        %1595 = vmatpush1.msra.mxu0 0.0
        %1596 = vmatprep.subr.mxu0 0.0
        %1597 = vmatpush1.msra.mxu0 0.0
        %1598 = vmatprep.subr.mxu0 0.0
        %1599 = vmatpush1.msra.mxu0 0.0
        %1600 = vmatprep.subr.mxu0 0.0
        %1601 = vmatpush1.msra.mxu0 0.0
        %1602 = vmatprep.subr.mxu0 0.0
        %1603 = vmatpush1.msra.mxu0 0.0
        %1604 = vmatprep.subr.mxu0 0.0
        %1605 = vmatpush1.msra.mxu0 0.0
        %1606 = vmatprep.subr.mxu0 0.0
        %1607 = vmatpush1.msra.mxu0 0.0
        %1608 = vmatprep.subr.mxu0 0.0
        %1609 = vmatpush1.msra.mxu0 0.0
        %1610 = vmatprep.subr.mxu0 0.0
        %1611 = vmatpush1.msra.mxu0 0.0
        %1612 = vmatprep.subr.mxu0 0.0
        %1613 = vmatpush1.msra.mxu0 0.0
        %1614 = vmatprep.subr.mxu0 0.0
        %1615 = vmatpush1.msra.mxu0 0.0
        %1616 = vmatprep.subr.mxu0 0.0
        %1617 = vmatpush1.msra.mxu0 0.0
        %1618 = vmatprep.subr.mxu0 0.0
        %1619 = vmatpush1.msra.mxu0 0.0
        %1620 = vmatprep.subr.mxu0 0.0
        %1621 = vmatpush1.msra.mxu0 0.0
        %1622 = vmatprep.subr.mxu0 0.0
        %1623 = vmatpush1.msra.mxu0 0.0
        %1624 = vmatprep.subr.mxu0 0.0
        %1625 = vmatpush1.msra.mxu0 0.0
        %1626 = vmatprep.subr.mxu0 0.0
        %1627 = vmatpush1.msra.mxu0 0.0
        %1628 = vmatprep.subr.mxu0 0.0
        %1629 = vmatpush1.msra.mxu0 0.0
        %1630 = vmatprep.subr.mxu0 0.0
        %1631 = vmatpush1.msra.mxu0 0.0
        %1632 = vmatprep.subr.mxu0 0.0
        %1633 = vmatpush1.msra.mxu0 0.0
        %1634 = vmatprep.subr.mxu0 0.0
        %1635 = vmatpush1.msra.mxu0 0.0
        %1636 = vmatprep.subr.mxu0 0.0
        %1637 = vmatpush1.msra.mxu0 0.0
        %1638 = vmatprep.subr.mxu0 0.0
        %1639 = vmatpush1.msra.mxu0 0.0
        %1640 = vmatprep.mubr.f32.mxu0 0.0
        %1641 = vmatmul.mubr.f32.gmra.mrb[0].mxu0 %v1529
        %v1642 = vpop.f32.mrb[0].mxu0
        %v1643 = vadd.f32 0.0, %v1642
        %v1644 = vpop.f32.mrb[0].mxu0
        %1645 = vmatprep.mubr.f32.mxu0 0.0
        %1646 = vmatmul.mubr.f32.gmra.mrb[0].mxu0 %v1532
        %v1647 = vpop.f32.mrb[0].mxu0
        %v1648 = vadd.f32 0.0, %v1647
        %v1649 = vpop.f32.mrb[0].mxu0
        %1650 = vmatprep.mubr.f32.mxu0 0.0
        %1651 = vmatmul.mubr.f32.gmra.mrb[0].mxu0 %v1535
        %v1652 = vpop.f32.mrb[0].mxu0
        %v1653 = vadd.f32 0.0, %v1652
        %v1654 = vpop.f32.mrb[0].mxu0
        %1655 = vmatprep.mubr.f32.mxu0 0.0
        %1656 = vmatmul.mubr.f32.gmra.mrb[0].mxu0 %v1538
        %v1657 = vpop.f32.mrb[0].mxu0
        %v1658 = vadd.f32 0.0, %v1657
        %v1659 = vpop.f32.mrb[0].mxu0
        %1660 = vmatprep.mubr.f32.mxu0 0.0
        %1661 = vmatmul.mubr.f32.gmra.mrb[0].mxu0 %v1541
        %v1662 = vpop.f32.mrb[0].mxu0
        %v1663 = vadd.f32 0.0, %v1662
        %v1664 = vpop.f32.mrb[0].mxu0
        %1665 = vmatprep.mubr.f32.mxu0 0.0
        %1666 = vmatmul.mubr.f32.gmra.mrb[0].mxu0 %v1544
        %v1667 = vpop.f32.mrb[0].mxu0
        %v1668 = vadd.f32 0.0, %v1667
        %v1669 = vpop.f32.mrb[0].mxu0
        %1670 = vmatprep.mubr.f32.mxu0 0.0
        %1671 = vmatmul.mubr.f32.gmra.mrb[0].mxu0 %v1547
        %v1672 = vpop.f32.mrb[0].mxu0
        %v1673 = vadd.f32 0.0, %v1672
        %v1674 = vpop.f32.mrb[0].mxu0
        %1675 = vmatprep.mubr.f32.mxu0 0.0
        %1676 = vmatmul.mubr.f32.gmra.mrb[0].mxu0 %v1550
        %v1677 = vpop.f32.mrb[0].mxu0
        %v1678 = vadd.f32 0.0, %v1677
        %v1679 = vpop.f32.mrb[0].mxu0
        %1680 = vmatprep.mubr.f32.mxu0 0.0
        %1681 = vmatmul.mubr.f32.gmra.mrb[0].mxu0 %v1553
        %v1682 = vpop.f32.mrb[0].mxu0
        %v1683 = vadd.f32 0.0, %v1682
        %v1684 = vpop.f32.mrb[0].mxu0
        %1685 = vmatprep.mubr.f32.mxu0 0.0
        %1686 = vmatmul.mubr.f32.gmra.mrb[0].mxu0 %v1556
        %v1687 = vpop.f32.mrb[0].mxu0
        %v1688 = vadd.f32 0.0, %v1687
        %v1689 = vpop.f32.mrb[0].mxu0
        %1690 = vmatprep.mubr.f32.mxu0 0.0
        %1691 = vmatmul.mubr.f32.gmra.mrb[0].mxu0 %v1559
        %v1692 = vpop.f32.mrb[0].mxu0
        %v1693 = vadd.f32 0.0, %v1692
        %v1694 = vpop.f32.mrb[0].mxu0
        %1695 = vmatprep.mubr.f32.mxu0 0.0
        %1696 = vmatmul.mubr.f32.gmra.mrb[0].mxu0 %v1562
        %v1697 = vpop.f32.mrb[0].mxu0
        %v1698 = vadd.f32 0.0, %v1697
        %v1699 = vpop.f32.mrb[0].mxu0
        %1700 = vmatprep.mubr.f32.mxu0 0.0
        %1701 = vmatmul.mubr.f32.gmra.mrb[0].mxu0 %v1565
        %v1702 = vpop.f32.mrb[0].mxu0
        %v1703 = vadd.f32 0.0, %v1702
        %v1704 = vpop.f32.mrb[0].mxu0
        %1705 = vmatprep.mubr.f32.mxu0 0.0
        %1706 = vmatmul.mubr.f32.gmra.mrb[0].mxu0 %v1568
        %v1707 = vpop.f32.mrb[0].mxu0
        %v1708 = vadd.f32 0.0, %v1707
        %v1709 = vpop.f32.mrb[0].mxu0
        %1710 = vmatprep.mubr.f32.mxu0 0.0
        %1711 = vmatmul.mubr.f32.gmra.mrb[0].mxu0 %v1571
        %v1712 = vpop.f32.mrb[0].mxu0
        %v1713 = vadd.f32 0.0, %v1712
        %v1714 = vpop.f32.mrb[0].mxu0
        %1715 = vmatprep.mubr.f32.mxu0 0.0
        %1716 = vmatmul.mubr.f32.gmra.mrb[0].mxu0 %v1574
        %v1717 = vpop.f32.mrb[0].mxu0
        %v1718 = vadd.f32 0.0, %v1717
        %v1719 = vpop.f32.mrb[0].mxu0
        %1720 = vdwg.mxu0
        %v1721 = vsub.f32 %v976, %v1643
        %v1722 = vsub.f32 %v977, %v1648
        %v1723 = vsub.f32 %v978, %v1653
        %v1724 = vsub.f32 %v979, %v1658
        %v1725 = vsub.f32 %v980, %v1663
        %v1726 = vsub.f32 %v981, %v1668
        %v1727 = vsub.f32 %v982, %v1673
        %v1728 = vsub.f32 %v983, %v1678
        %v1729 = vsub.f32 %v984, %v1683
        %v1730 = vsub.f32 %v985, %v1688
        %v1731 = vsub.f32 %v986, %v1693
        %v1732 = vsub.f32 %v987, %v1698
        %v1733 = vsub.f32 %v988, %v1703
        %v1734 = vsub.f32 %v989, %v1708
        %v1735 = vsub.f32 %v990, %v1713
        %v1736 = vsub.f32 %v991, %v1718
        %v1737 = vadd.f32 %v992, %v1643
        %v1738 = vadd.f32 %v993, %v1648
        %v1739 = vadd.f32 %v994, %v1653
        %v1740 = vadd.f32 %v995, %v1658
        %v1741 = vadd.f32 %v996, %v1663
        %v1742 = vadd.f32 %v997, %v1668
        %v1743 = vadd.f32 %v998, %v1673
        %v1744 = vadd.f32 %v999, %v1678
        %v1745 = vadd.f32 %v1000, %v1683
        %v1746 = vadd.f32 %v1001, %v1688
        %v1747 = vadd.f32 %v1002, %v1693
        %v1748 = vadd.f32 %v1003, %v1698
        %v1749 = vadd.f32 %v1004, %v1703
        %v1750 = vadd.f32 %v1005, %v1708
        %v1751 = vadd.f32 %v1006, %v1713
        %v1752 = vadd.f32 %v1007, %v1718
        %s1753 = scalar_lea.vmem [#allocation5], 32
        %v1754 = vld [vmem:[%s1753] sm:$0xff]
        %v1755 = vld [vmem:[%s1753 + $0x8] sm:$0xff]
        %v1756 = vlaneseq
        %v1757 = vshrl.u32 %v1756, 7
        %v1758 = vsub.s32 2, %v1757
        %v1759 = vrot.slane %v260, %v1758
        %1760 = vmatprep.subr.mxu0 0.0
        %1761 = vmatpush1.xpose.msra.mxu0 %v1754
        %1762 = vmatprep.subr.mxu0 0.0
        %1763 = vmatpush1.xpose.msra.mxu0 %v1755
        %1764 = vmatprep.subr.mxu0 0.0
        %1765 = vmatpush1.xpose.msra.mxu0 0.0
        %1766 = vmatprep.subr.mxu0 0.0
        %1767 = vmatpush1.xpose.msra.mxu0 0.0
        %1768 = vmatprep.subr.mxu0 0.0
        %1769 = vmatpush1.xpose.msra.mxu0 0.0
        %1770 = vmatprep.subr.mxu0 0.0
        %1771 = vmatpush1.xpose.msra.mxu0 0.0
        %1772 = vmatprep.subr.mxu0 0.0
        %1773 = vmatpush1.xpose.msra.mxu0 0.0
        %1774 = vmatprep.subr.mxu0 0.0
        %1775 = vmatpush1.xpose.msra.mxu0 0.0
        %1776 = vmatprep.subr.mxu0 0.0
        %1777 = vmatpush1.xpose.msra.mxu0 0.0
        %1778 = vmatprep.subr.mxu0 0.0
        %1779 = vmatpush1.xpose.msra.mxu0 0.0
        %1780 = vmatprep.subr.mxu0 0.0
        %1781 = vmatpush1.xpose.msra.mxu0 0.0
        %1782 = vmatprep.subr.mxu0 0.0
        %1783 = vmatpush1.xpose.msra.mxu0 0.0
        %1784 = vmatprep.subr.mxu0 0.0
        %1785 = vmatpush1.xpose.msra.mxu0 0.0
        %1786 = vmatprep.subr.mxu0 0.0
        %1787 = vmatpush1.xpose.msra.mxu0 0.0
        %1788 = vmatprep.subr.mxu0 0.0
        %1789 = vmatpush1.xpose.msra.mxu0 0.0
        %1790 = vmatprep.subr.mxu0 0.0
        %1791 = vmatpush1.xpose.msra.mxu0 0.0
        %1792 = vmatprep.subr.mxu0 0.0
        %1793 = vmatpush1.xpose.msra.mxu0 0.0
        %1794 = vmatprep.subr.mxu0 0.0
        %1795 = vmatpush1.xpose.msra.mxu0 0.0
        %1796 = vmatprep.subr.mxu0 0.0
        %1797 = vmatpush1.xpose.msra.mxu0 0.0
        %1798 = vmatprep.subr.mxu0 0.0
        %1799 = vmatpush1.xpose.msra.mxu0 0.0
        %1800 = vmatprep.subr.mxu0 0.0
        %1801 = vmatpush1.xpose.msra.mxu0 0.0
        %1802 = vmatprep.subr.mxu0 0.0
        %1803 = vmatpush1.xpose.msra.mxu0 0.0
        %1804 = vmatprep.subr.mxu0 0.0
        %1805 = vmatpush1.xpose.msra.mxu0 0.0
        %1806 = vmatprep.subr.mxu0 0.0
        %1807 = vmatpush1.xpose.msra.mxu0 0.0
        %1808 = vmatprep.subr.mxu0 0.0
        %1809 = vmatpush1.xpose.msra.mxu0 0.0
        %1810 = vmatprep.subr.mxu0 0.0
        %1811 = vmatpush1.xpose.msra.mxu0 0.0
        %1812 = vmatprep.subr.mxu0 0.0
        %1813 = vmatpush1.xpose.msra.mxu0 0.0
        %1814 = vmatprep.subr.mxu0 0.0
        %1815 = vmatpush1.xpose.msra.mxu0 0.0
        %1816 = vmatprep.subr.mxu0 0.0
        %1817 = vmatpush1.xpose.msra.mxu0 0.0
        %1818 = vmatprep.subr.mxu0 0.0
        %1819 = vmatpush1.xpose.msra.mxu0 0.0
        %1820 = vmatprep.subr.mxu0 0.0
        %1821 = vmatpush1.xpose.msra.mxu0 0.0
        %1822 = vmatprep.subr.mxu0 0.0
        %1823 = vmatpush1.xpose.msra.mxu0 0.0
        %1824 = vmatprep.mubr.f32.mxu0 0.0
        %1825 = vmatmul.mubr.f32.gmra.mrb[0].mxu0 %v1721
        %v1826 = vpop.f32.mrb[0].mxu0
        %v1827 = vadd.f32 %v1759, %v1826
        %v1828 = vpop.f32.mrb[0].mxu0
        %1829 = vmatprep.mubr.f32.mxu0 0.0
        %1830 = vmatmul.mubr.f32.gmra.mrb[0].mxu0 %v1722
        %v1831 = vpop.f32.mrb[0].mxu0
        %v1832 = vadd.f32 %v1759, %v1831
        %v1833 = vpop.f32.mrb[0].mxu0
        %1834 = vmatprep.mubr.f32.mxu0 0.0
        %1835 = vmatmul.mubr.f32.gmra.mrb[0].mxu0 %v1723
        %v1836 = vpop.f32.mrb[0].mxu0
        %v1837 = vadd.f32 %v1759, %v1836
        %v1838 = vpop.f32.mrb[0].mxu0
        %1839 = vmatprep.mubr.f32.mxu0 0.0
        %1840 = vmatmul.mubr.f32.gmra.mrb[0].mxu0 %v1724
        %v1841 = vpop.f32.mrb[0].mxu0
        %v1842 = vadd.f32 %v1759, %v1841
        %v1843 = vpop.f32.mrb[0].mxu0
        %1844 = vmatprep.mubr.f32.mxu0 0.0
        %1845 = vmatmul.mubr.f32.gmra.mrb[0].mxu0 %v1725
        %v1846 = vpop.f32.mrb[0].mxu0
        %v1847 = vadd.f32 %v1759, %v1846
        %v1848 = vpop.f32.mrb[0].mxu0
        %1849 = vmatprep.mubr.f32.mxu0 0.0
        %1850 = vmatmul.mubr.f32.gmra.mrb[0].mxu0 %v1726
        %v1851 = vpop.f32.mrb[0].mxu0
        %v1852 = vadd.f32 %v1759, %v1851
        %v1853 = vpop.f32.mrb[0].mxu0
        %1854 = vmatprep.mubr.f32.mxu0 0.0
        %1855 = vmatmul.mubr.f32.gmra.mrb[0].mxu0 %v1727
        %v1856 = vpop.f32.mrb[0].mxu0
        %v1857 = vadd.f32 %v1759, %v1856
        %v1858 = vpop.f32.mrb[0].mxu0
        %1859 = vmatprep.mubr.f32.mxu0 0.0
        %1860 = vmatmul.mubr.f32.gmra.mrb[0].mxu0 %v1728
        %v1861 = vpop.f32.mrb[0].mxu0
        %v1862 = vadd.f32 %v1759, %v1861
        %v1863 = vpop.f32.mrb[0].mxu0
        %1864 = vmatprep.mubr.f32.mxu0 0.0
        %1865 = vmatmul.mubr.f32.gmra.mrb[0].mxu0 %v1729
        %v1866 = vpop.f32.mrb[0].mxu0
        %v1867 = vadd.f32 %v1759, %v1866
        %v1868 = vpop.f32.mrb[0].mxu0
        %1869 = vmatprep.mubr.f32.mxu0 0.0
        %1870 = vmatmul.mubr.f32.gmra.mrb[0].mxu0 %v1730
        %v1871 = vpop.f32.mrb[0].mxu0
        %v1872 = vadd.f32 %v1759, %v1871
        %v1873 = vpop.f32.mrb[0].mxu0
        %1874 = vmatprep.mubr.f32.mxu0 0.0
        %1875 = vmatmul.mubr.f32.gmra.mrb[0].mxu0 %v1731
        %v1876 = vpop.f32.mrb[0].mxu0
        %v1877 = vadd.f32 %v1759, %v1876
        %v1878 = vpop.f32.mrb[0].mxu0
        %1879 = vmatprep.mubr.f32.mxu0 0.0
        %1880 = vmatmul.mubr.f32.gmra.mrb[0].mxu0 %v1732
        %v1881 = vpop.f32.mrb[0].mxu0
        %v1882 = vadd.f32 %v1759, %v1881
        %v1883 = vpop.f32.mrb[0].mxu0
        %1884 = vmatprep.mubr.f32.mxu0 0.0
        %1885 = vmatmul.mubr.f32.gmra.mrb[0].mxu0 %v1733
        %v1886 = vpop.f32.mrb[0].mxu0
        %v1887 = vadd.f32 %v1759, %v1886
        %v1888 = vpop.f32.mrb[0].mxu0
        %1889 = vmatprep.mubr.f32.mxu0 0.0
        %1890 = vmatmul.mubr.f32.gmra.mrb[0].mxu0 %v1734
        %v1891 = vpop.f32.mrb[0].mxu0
        %v1892 = vadd.f32 %v1759, %v1891
        %v1893 = vpop.f32.mrb[0].mxu0
        %1894 = vmatprep.mubr.f32.mxu0 0.0
        %1895 = vmatmul.mubr.f32.gmra.mrb[0].mxu0 %v1735
        %v1896 = vpop.f32.mrb[0].mxu0
        %v1897 = vadd.f32 %v1759, %v1896
        %v1898 = vpop.f32.mrb[0].mxu0
        %1899 = vmatprep.mubr.f32.mxu0 0.0
        %1900 = vmatmul.mubr.f32.gmra.mrb[0].mxu0 %v1736
        %v1901 = vpop.f32.mrb[0].mxu0
        %v1902 = vadd.f32 %v1759, %v1901
        %v1903 = vpop.f32.mrb[0].mxu0
        %1904 = vdwg.mxu0
        %v1905 = vsel %vm414, %v1827, -inf
        %1906 = vmax.xlane.f32.xlu0 %v1905
        %v1907 = vpop.xlane.xlu0 %1906
        %v1908 = vsel %vm414, %v1832, -inf
        %1909 = vmax.xlane.f32.xlu0 %v1908
        %v1910 = vpop.xlane.xlu0 %1909
        %v1911 = vsel %vm414, %v1837, -inf
        %1912 = vmax.xlane.f32.xlu0 %v1911
        %v1913 = vpop.xlane.xlu0 %1912
        %v1914 = vsel %vm414, %v1842, -inf
        %1915 = vmax.xlane.f32.xlu0 %v1914
        %v1916 = vpop.xlane.xlu0 %1915
        %v1917 = vsel %vm414, %v1847, -inf
        %1918 = vmax.xlane.f32.xlu0 %v1917
        %v1919 = vpop.xlane.xlu0 %1918
        %v1920 = vsel %vm414, %v1852, -inf
        %1921 = vmax.xlane.f32.xlu0 %v1920
        %v1922 = vpop.xlane.xlu0 %1921
        %v1923 = vsel %vm414, %v1857, -inf
        %1924 = vmax.xlane.f32.xlu0 %v1923
        %v1925 = vpop.xlane.xlu0 %1924
        %v1926 = vsel %vm414, %v1862, -inf
        %1927 = vmax.xlane.f32.xlu0 %v1926
        %v1928 = vpop.xlane.xlu0 %1927
        %v1929 = vsel %vm414, %v1867, -inf
        %1930 = vmax.xlane.f32.xlu0 %v1929
        %v1931 = vpop.xlane.xlu0 %1930
        %v1932 = vsel %vm414, %v1872, -inf
        %1933 = vmax.xlane.f32.xlu0 %v1932
        %v1934 = vpop.xlane.xlu0 %1933
        %v1935 = vsel %vm414, %v1877, -inf
        %1936 = vmax.xlane.f32.xlu0 %v1935
        %v1937 = vpop.xlane.xlu0 %1936
        %v1938 = vsel %vm414, %v1882, -inf
        %1939 = vmax.xlane.f32.xlu0 %v1938
        %v1940 = vpop.xlane.xlu0 %1939
        %v1941 = vsel %vm414, %v1887, -inf
        %1942 = vmax.xlane.f32.xlu0 %v1941
        %v1943 = vpop.xlane.xlu0 %1942
        %v1944 = vsel %vm414, %v1892, -inf
        %1945 = vmax.xlane.f32.xlu0 %v1944
        %v1946 = vpop.xlane.xlu0 %1945
        %v1947 = vsel %vm414, %v1897, -inf
        %1948 = vmax.xlane.f32.xlu0 %v1947
        %v1949 = vpop.xlane.xlu0 %1948
        %v1950 = vsel %vm414, %v1902, -inf
        %1951 = vmax.xlane.f32.xlu0 %v1950
        %v1952 = vpop.xlane.xlu0 %1951
        %vm1953 = vcmp.eq.f32.partialorder %v1827, %v1907
        %vm1954 = vcmp.eq.f32.partialorder %v1832, %v1910
        %vm1955 = vcmp.eq.f32.partialorder %v1837, %v1913
        %vm1956 = vcmp.eq.f32.partialorder %v1842, %v1916
        %vm1957 = vcmp.eq.f32.partialorder %v1847, %v1919
        %vm1958 = vcmp.eq.f32.partialorder %v1852, %v1922
        %vm1959 = vcmp.eq.f32.partialorder %v1857, %v1925
        %vm1960 = vcmp.eq.f32.partialorder %v1862, %v1928
        %vm1961 = vcmp.eq.f32.partialorder %v1867, %v1931
        %vm1962 = vcmp.eq.f32.partialorder %v1872, %v1934
        %vm1963 = vcmp.eq.f32.partialorder %v1877, %v1937
        %vm1964 = vcmp.eq.f32.partialorder %v1882, %v1940
        %vm1965 = vcmp.eq.f32.partialorder %v1887, %v1943
        %vm1966 = vcmp.eq.f32.partialorder %v1892, %v1946
        %vm1967 = vcmp.eq.f32.partialorder %v1897, %v1949
        %vm1968 = vcmp.eq.f32.partialorder %v1902, %v1952
        %v1969 = vsel %vm1953, %v262, 16
        %v1970 = vsel %vm1954, %v262, 16
        %v1971 = vsel %vm1955, %v262, 16
        %v1972 = vsel %vm1956, %v262, 16
        %v1973 = vsel %vm1957, %v262, 16
        %v1974 = vsel %vm1958, %v262, 16
        %v1975 = vsel %vm1959, %v262, 16
        %v1976 = vsel %vm1960, %v262, 16
        %v1977 = vsel %vm1961, %v262, 16
        %v1978 = vsel %vm1962, %v262, 16
        %v1979 = vsel %vm1963, %v262, 16
        %v1980 = vsel %vm1964, %v262, 16
        %v1981 = vsel %vm1965, %v262, 16
        %v1982 = vsel %vm1966, %v262, 16
        %v1983 = vsel %vm1967, %v262, 16
        %v1984 = vsel %vm1968, %v262, 16
        %v1985 = vsel %vm414, %v1969, 2147483647
        %v1986 = vand.u32 %v1985, 65535
        %v1987 = vshra.s32 %v1985, 16
        %v1988 = vcvt.s32.f32 %v1986
        %v1989 = vcvt.s32.f32 %v1987
        %1990 = vmin.xlane.f32.xlu0 %v1989
        %v1991 = vpop.xlane.xlu0 %1990
        %vm1992 = vcmp.eq.f32.partialorder %v1989, %v1991
        %v1993 = vsel %vm1992, %v1988, inf
        %1994 = vmin.xlane.f32.xlu0 %v1993
        %v1995 = vpop.xlane.xlu0 %1994
        %v1996 = vcvt.f32.s32 %v1995
        %v1997 = vcvt.f32.s32 %v1991
        %v1998 = vshll.u32 %v1997, 16
        %v1999 = vadd.s32 %v1998, %v1996
        %v2000 = vsel %vm414, %v1970, 2147483647
        %v2001 = vand.u32 %v2000, 65535
        %v2002 = vshra.s32 %v2000, 16
        %v2003 = vcvt.s32.f32 %v2001
        %v2004 = vcvt.s32.f32 %v2002
        %2005 = vmin.xlane.f32.xlu0 %v2004
        %v2006 = vpop.xlane.xlu0 %2005
        %vm2007 = vcmp.eq.f32.partialorder %v2004, %v2006
        %v2008 = vsel %vm2007, %v2003, inf
        %2009 = vmin.xlane.f32.xlu0 %v2008
        %v2010 = vpop.xlane.xlu0 %2009
        %v2011 = vcvt.f32.s32 %v2010
        %v2012 = vcvt.f32.s32 %v2006
        %v2013 = vshll.u32 %v2012, 16
        %v2014 = vadd.s32 %v2013, %v2011
        %v2015 = vsel %vm414, %v1971, 2147483647
        %v2016 = vand.u32 %v2015, 65535
        %v2017 = vshra.s32 %v2015, 16
        %v2018 = vcvt.s32.f32 %v2016
        %v2019 = vcvt.s32.f32 %v2017
        %2020 = vmin.xlane.f32.xlu0 %v2019
        %v2021 = vpop.xlane.xlu0 %2020
        %vm2022 = vcmp.eq.f32.partialorder %v2019, %v2021
        %v2023 = vsel %vm2022, %v2018, inf
        %2024 = vmin.xlane.f32.xlu0 %v2023
        %v2025 = vpop.xlane.xlu0 %2024
        %v2026 = vcvt.f32.s32 %v2025
        %v2027 = vcvt.f32.s32 %v2021
        %v2028 = vshll.u32 %v2027, 16
        %v2029 = vadd.s32 %v2028, %v2026
        %v2030 = vsel %vm414, %v1972, 2147483647
        %v2031 = vand.u32 %v2030, 65535
        %v2032 = vshra.s32 %v2030, 16
        %v2033 = vcvt.s32.f32 %v2031
        %v2034 = vcvt.s32.f32 %v2032
        %2035 = vmin.xlane.f32.xlu0 %v2034
        %v2036 = vpop.xlane.xlu0 %2035
        %vm2037 = vcmp.eq.f32.partialorder %v2034, %v2036
        %v2038 = vsel %vm2037, %v2033, inf
        %2039 = vmin.xlane.f32.xlu0 %v2038
        %v2040 = vpop.xlane.xlu0 %2039
        %v2041 = vcvt.f32.s32 %v2040
        %v2042 = vcvt.f32.s32 %v2036
        %v2043 = vshll.u32 %v2042, 16
        %v2044 = vadd.s32 %v2043, %v2041
        %v2045 = vsel %vm414, %v1973, 2147483647
        %v2046 = vand.u32 %v2045, 65535
        %v2047 = vshra.s32 %v2045, 16
        %v2048 = vcvt.s32.f32 %v2046
        %v2049 = vcvt.s32.f32 %v2047
        %2050 = vmin.xlane.f32.xlu0 %v2049
        %v2051 = vpop.xlane.xlu0 %2050
        %vm2052 = vcmp.eq.f32.partialorder %v2049, %v2051
        %v2053 = vsel %vm2052, %v2048, inf
        %2054 = vmin.xlane.f32.xlu0 %v2053
        %v2055 = vpop.xlane.xlu0 %2054
        %v2056 = vcvt.f32.s32 %v2055
        %v2057 = vcvt.f32.s32 %v2051
        %v2058 = vshll.u32 %v2057, 16
        %v2059 = vadd.s32 %v2058, %v2056
        %v2060 = vsel %vm414, %v1974, 2147483647
        %v2061 = vand.u32 %v2060, 65535
        %v2062 = vshra.s32 %v2060, 16
        %v2063 = vcvt.s32.f32 %v2061
        %v2064 = vcvt.s32.f32 %v2062
        %2065 = vmin.xlane.f32.xlu0 %v2064
        %v2066 = vpop.xlane.xlu0 %2065
        %vm2067 = vcmp.eq.f32.partialorder %v2064, %v2066
        %v2068 = vsel %vm2067, %v2063, inf
        %2069 = vmin.xlane.f32.xlu0 %v2068
        %v2070 = vpop.xlane.xlu0 %2069
        %v2071 = vcvt.f32.s32 %v2070
        %v2072 = vcvt.f32.s32 %v2066
        %v2073 = vshll.u32 %v2072, 16
        %v2074 = vadd.s32 %v2073, %v2071
        %v2075 = vsel %vm414, %v1975, 2147483647
        %v2076 = vand.u32 %v2075, 65535
        %v2077 = vshra.s32 %v2075, 16
        %v2078 = vcvt.s32.f32 %v2076
        %v2079 = vcvt.s32.f32 %v2077
        %2080 = vmin.xlane.f32.xlu0 %v2079
        %v2081 = vpop.xlane.xlu0 %2080
        %vm2082 = vcmp.eq.f32.partialorder %v2079, %v2081
        %v2083 = vsel %vm2082, %v2078, inf
        %2084 = vmin.xlane.f32.xlu0 %v2083
        %v2085 = vpop.xlane.xlu0 %2084
        %v2086 = vcvt.f32.s32 %v2085
        %v2087 = vcvt.f32.s32 %v2081
        %v2088 = vshll.u32 %v2087, 16
        %v2089 = vadd.s32 %v2088, %v2086
        %v2090 = vsel %vm414, %v1976, 2147483647
        %v2091 = vand.u32 %v2090, 65535
        %v2092 = vshra.s32 %v2090, 16
        %v2093 = vcvt.s32.f32 %v2091
        %v2094 = vcvt.s32.f32 %v2092
        %2095 = vmin.xlane.f32.xlu0 %v2094
        %v2096 = vpop.xlane.xlu0 %2095
        %vm2097 = vcmp.eq.f32.partialorder %v2094, %v2096
        %v2098 = vsel %vm2097, %v2093, inf
        %2099 = vmin.xlane.f32.xlu0 %v2098
        %v2100 = vpop.xlane.xlu0 %2099
        %v2101 = vcvt.f32.s32 %v2100
        %v2102 = vcvt.f32.s32 %v2096
        %v2103 = vshll.u32 %v2102, 16
        %v2104 = vadd.s32 %v2103, %v2101
        %v2105 = vsel %vm414, %v1977, 2147483647
        %v2106 = vand.u32 %v2105, 65535
        %v2107 = vshra.s32 %v2105, 16
        %v2108 = vcvt.s32.f32 %v2106
        %v2109 = vcvt.s32.f32 %v2107
        %2110 = vmin.xlane.f32.xlu0 %v2109
        %v2111 = vpop.xlane.xlu0 %2110
        %vm2112 = vcmp.eq.f32.partialorder %v2109, %v2111
        %v2113 = vsel %vm2112, %v2108, inf
        %2114 = vmin.xlane.f32.xlu0 %v2113
        %v2115 = vpop.xlane.xlu0 %2114
        %v2116 = vcvt.f32.s32 %v2115
        %v2117 = vcvt.f32.s32 %v2111
        %v2118 = vshll.u32 %v2117, 16
        %v2119 = vadd.s32 %v2118, %v2116
        %v2120 = vsel %vm414, %v1978, 2147483647
        %v2121 = vand.u32 %v2120, 65535
        %v2122 = vshra.s32 %v2120, 16
        %v2123 = vcvt.s32.f32 %v2121
        %v2124 = vcvt.s32.f32 %v2122
        %2125 = vmin.xlane.f32.xlu0 %v2124
        %v2126 = vpop.xlane.xlu0 %2125
        %vm2127 = vcmp.eq.f32.partialorder %v2124, %v2126
        %v2128 = vsel %vm2127, %v2123, inf
        %2129 = vmin.xlane.f32.xlu0 %v2128
        %v2130 = vpop.xlane.xlu0 %2129
        %v2131 = vcvt.f32.s32 %v2130
        %v2132 = vcvt.f32.s32 %v2126
        %v2133 = vshll.u32 %v2132, 16
        %v2134 = vadd.s32 %v2133, %v2131
        %v2135 = vsel %vm414, %v1979, 2147483647
        %v2136 = vand.u32 %v2135, 65535
        %v2137 = vshra.s32 %v2135, 16
        %v2138 = vcvt.s32.f32 %v2136
        %v2139 = vcvt.s32.f32 %v2137
        %2140 = vmin.xlane.f32.xlu0 %v2139
        %v2141 = vpop.xlane.xlu0 %2140
        %vm2142 = vcmp.eq.f32.partialorder %v2139, %v2141
        %v2143 = vsel %vm2142, %v2138, inf
        %2144 = vmin.xlane.f32.xlu0 %v2143
        %v2145 = vpop.xlane.xlu0 %2144
        %v2146 = vcvt.f32.s32 %v2145
        %v2147 = vcvt.f32.s32 %v2141
        %v2148 = vshll.u32 %v2147, 16
        %v2149 = vadd.s32 %v2148, %v2146
        %v2150 = vsel %vm414, %v1980, 2147483647
        %v2151 = vand.u32 %v2150, 65535
        %v2152 = vshra.s32 %v2150, 16
        %v2153 = vcvt.s32.f32 %v2151
        %v2154 = vcvt.s32.f32 %v2152
        %2155 = vmin.xlane.f32.xlu0 %v2154
        %v2156 = vpop.xlane.xlu0 %2155
        %vm2157 = vcmp.eq.f32.partialorder %v2154, %v2156
        %v2158 = vsel %vm2157, %v2153, inf
        %2159 = vmin.xlane.f32.xlu0 %v2158
        %v2160 = vpop.xlane.xlu0 %2159
        %v2161 = vcvt.f32.s32 %v2160
        %v2162 = vcvt.f32.s32 %v2156
        %v2163 = vshll.u32 %v2162, 16
        %v2164 = vadd.s32 %v2163, %v2161
        %v2165 = vsel %vm414, %v1981, 2147483647
        %v2166 = vand.u32 %v2165, 65535
        %v2167 = vshra.s32 %v2165, 16
        %v2168 = vcvt.s32.f32 %v2166
        %v2169 = vcvt.s32.f32 %v2167
        %2170 = vmin.xlane.f32.xlu0 %v2169
        %v2171 = vpop.xlane.xlu0 %2170
        %vm2172 = vcmp.eq.f32.partialorder %v2169, %v2171
        %v2173 = vsel %vm2172, %v2168, inf
        %2174 = vmin.xlane.f32.xlu0 %v2173
        %v2175 = vpop.xlane.xlu0 %2174
        %v2176 = vcvt.f32.s32 %v2175
        %v2177 = vcvt.f32.s32 %v2171
        %v2178 = vshll.u32 %v2177, 16
        %v2179 = vadd.s32 %v2178, %v2176
        %v2180 = vsel %vm414, %v1982, 2147483647
        %v2181 = vand.u32 %v2180, 65535
        %v2182 = vshra.s32 %v2180, 16
        %v2183 = vcvt.s32.f32 %v2181
        %v2184 = vcvt.s32.f32 %v2182
        %2185 = vmin.xlane.f32.xlu0 %v2184
        %v2186 = vpop.xlane.xlu0 %2185
        %vm2187 = vcmp.eq.f32.partialorder %v2184, %v2186
        %v2188 = vsel %vm2187, %v2183, inf
        %2189 = vmin.xlane.f32.xlu0 %v2188
        %v2190 = vpop.xlane.xlu0 %2189
        %v2191 = vcvt.f32.s32 %v2190
        %v2192 = vcvt.f32.s32 %v2186
        %v2193 = vshll.u32 %v2192, 16
        %v2194 = vadd.s32 %v2193, %v2191
        %v2195 = vsel %vm414, %v1983, 2147483647
        %v2196 = vand.u32 %v2195, 65535
        %v2197 = vshra.s32 %v2195, 16
        %v2198 = vcvt.s32.f32 %v2196
        %v2199 = vcvt.s32.f32 %v2197
        %2200 = vmin.xlane.f32.xlu0 %v2199
        %v2201 = vpop.xlane.xlu0 %2200
        %vm2202 = vcmp.eq.f32.partialorder %v2199, %v2201
        %v2203 = vsel %vm2202, %v2198, inf
        %2204 = vmin.xlane.f32.xlu0 %v2203
        %v2205 = vpop.xlane.xlu0 %2204
        %v2206 = vcvt.f32.s32 %v2205
        %v2207 = vcvt.f32.s32 %v2201
        %v2208 = vshll.u32 %v2207, 16
        %v2209 = vadd.s32 %v2208, %v2206
        %v2210 = vsel %vm414, %v1984, 2147483647
        %v2211 = vand.u32 %v2210, 65535
        %v2212 = vshra.s32 %v2210, 16
        %v2213 = vcvt.s32.f32 %v2211
        %v2214 = vcvt.s32.f32 %v2212
        %2215 = vmin.xlane.f32.xlu0 %v2214
        %v2216 = vpop.xlane.xlu0 %2215
        %vm2217 = vcmp.eq.f32.partialorder %v2214, %v2216
        %v2218 = vsel %vm2217, %v2213, inf
        %2219 = vmin.xlane.f32.xlu0 %v2218
        %v2220 = vpop.xlane.xlu0 %2219
        %v2221 = vcvt.f32.s32 %v2220
        %v2222 = vcvt.f32.s32 %v2216
        %v2223 = vshll.u32 %v2222, 16
        %v2224 = vadd.s32 %v2223, %v2221
        %vm2225 = vcmp.eq.s32.totalorder %v262, %v1999
        %vm2226 = vcmp.eq.s32.totalorder %v262, %v2014
        %vm2227 = vcmp.eq.s32.totalorder %v262, %v2029
        %vm2228 = vcmp.eq.s32.totalorder %v262, %v2044
        %vm2229 = vcmp.eq.s32.totalorder %v262, %v2059
        %vm2230 = vcmp.eq.s32.totalorder %v262, %v2074
        %vm2231 = vcmp.eq.s32.totalorder %v262, %v2089
        %vm2232 = vcmp.eq.s32.totalorder %v262, %v2104
        %vm2233 = vcmp.eq.s32.totalorder %v262, %v2119
        %vm2234 = vcmp.eq.s32.totalorder %v262, %v2134
        %vm2235 = vcmp.eq.s32.totalorder %v262, %v2149
        %vm2236 = vcmp.eq.s32.totalorder %v262, %v2164
        %vm2237 = vcmp.eq.s32.totalorder %v262, %v2179
        %vm2238 = vcmp.eq.s32.totalorder %v262, %v2194
        %vm2239 = vcmp.eq.s32.totalorder %v262, %v2209
        %vm2240 = vcmp.eq.s32.totalorder %v262, %v2224
        %v2241 = vsel %vm2225, 1, 0
        %v2242 = vsel %vm2226, 1, 0
        %v2243 = vsel %vm2227, 1, 0
        %v2244 = vsel %vm2228, 1, 0
        %v2245 = vsel %vm2229, 1, 0
        %v2246 = vsel %vm2230, 1, 0
        %v2247 = vsel %vm2231, 1, 0
        %v2248 = vsel %vm2232, 1, 0
        %v2249 = vsel %vm2233, 1, 0
        %v2250 = vsel %vm2234, 1, 0
        %v2251 = vsel %vm2235, 1, 0
        %v2252 = vsel %vm2236, 1, 0
        %v2253 = vsel %vm2237, 1, 0
        %v2254 = vsel %vm2238, 1, 0
        %v2255 = vsel %vm2239, 1, 0
        %v2256 = vsel %vm2240, 1, 0
        %v2257 = vcvt.s32.f32 %v2241
        %v2258 = vcvt.s32.f32 %v2242
        %v2259 = vcvt.s32.f32 %v2243
        %v2260 = vcvt.s32.f32 %v2244
        %v2261 = vcvt.s32.f32 %v2245
        %v2262 = vcvt.s32.f32 %v2246
        %v2263 = vcvt.s32.f32 %v2247
        %v2264 = vcvt.s32.f32 %v2248
        %v2265 = vcvt.s32.f32 %v2249
        %v2266 = vcvt.s32.f32 %v2250
        %v2267 = vcvt.s32.f32 %v2251
        %v2268 = vcvt.s32.f32 %v2252
        %v2269 = vcvt.s32.f32 %v2253
        %v2270 = vcvt.s32.f32 %v2254
        %v2271 = vcvt.s32.f32 %v2255
        %v2272 = vcvt.s32.f32 %v2256
        %v2274 = vsel %vm414, %v2257, 0
        %v2277 = vsel %vm414, %v2258, 0
        %v2280 = vsel %vm414, %v2259, 0
        %v2283 = vsel %vm414, %v2260, 0
        %v2286 = vsel %vm414, %v2261, 0
        %v2289 = vsel %vm414, %v2262, 0
        %v2292 = vsel %vm414, %v2263, 0
        %v2295 = vsel %vm414, %v2264, 0
        %v2298 = vsel %vm414, %v2265, 0
        %v2301 = vsel %vm414, %v2266, 0
        %v2304 = vsel %vm414, %v2267, 0
        %v2307 = vsel %vm414, %v2268, 0
        %v2310 = vsel %vm414, %v2269, 0
        %v2313 = vsel %vm414, %v2270, 0
        %v2316 = vsel %vm414, %v2271, 0
        %v2319 = vsel %vm414, %v2272, 0
        %2321 = vmatprep.subr.mxu0 0.0
        %2322 = vmatpush1.msra.mxu0 %v1754
        %2323 = vmatprep.subr.mxu0 0.0
        %2324 = vmatpush1.msra.mxu0 %v1755
        %2325 = vmatprep.subr.mxu0 0.0
        %2326 = vmatpush1.msra.mxu0 0.0
        %2327 = vmatprep.subr.mxu0 0.0
        %2328 = vmatpush1.msra.mxu0 0.0
        %2329 = vmatprep.subr.mxu0 0.0
        %2330 = vmatpush1.msra.mxu0 0.0
        %2331 = vmatprep.subr.mxu0 0.0
        %2332 = vmatpush1.msra.mxu0 0.0
        %2333 = vmatprep.subr.mxu0 0.0
        %2334 = vmatpush1.msra.mxu0 0.0
        %2335 = vmatprep.subr.mxu0 0.0
        %2336 = vmatpush1.msra.mxu0 0.0
        %2337 = vmatprep.subr.mxu0 0.0
        %2338 = vmatpush1.msra.mxu0 0.0
        %2339 = vmatprep.subr.mxu0 0.0
        %2340 = vmatpush1.msra.mxu0 0.0
        %2341 = vmatprep.subr.mxu0 0.0
        %2342 = vmatpush1.msra.mxu0 0.0
        %2343 = vmatprep.subr.mxu0 0.0
        %2344 = vmatpush1.msra.mxu0 0.0
        %2345 = vmatprep.subr.mxu0 0.0
        %2346 = vmatpush1.msra.mxu0 0.0
        %2347 = vmatprep.subr.mxu0 0.0
        %2348 = vmatpush1.msra.mxu0 0.0
        %2349 = vmatprep.subr.mxu0 0.0
        %2350 = vmatpush1.msra.mxu0 0.0
        %2351 = vmatprep.subr.mxu0 0.0
        %2352 = vmatpush1.msra.mxu0 0.0
        %2353 = vmatprep.subr.mxu0 0.0
        %2354 = vmatpush1.msra.mxu0 0.0
        %2355 = vmatprep.subr.mxu0 0.0
        %2356 = vmatpush1.msra.mxu0 0.0
        %2357 = vmatprep.subr.mxu0 0.0
        %2358 = vmatpush1.msra.mxu0 0.0
        %2359 = vmatprep.subr.mxu0 0.0
        %2360 = vmatpush1.msra.mxu0 0.0
        %2361 = vmatprep.subr.mxu0 0.0
        %2362 = vmatpush1.msra.mxu0 0.0
        %2363 = vmatprep.subr.mxu0 0.0
        %2364 = vmatpush1.msra.mxu0 0.0
        %2365 = vmatprep.subr.mxu0 0.0
        %2366 = vmatpush1.msra.mxu0 0.0
        %2367 = vmatprep.subr.mxu0 0.0
        %2368 = vmatpush1.msra.mxu0 0.0
        %2369 = vmatprep.subr.mxu0 0.0
        %2370 = vmatpush1.msra.mxu0 0.0
        %2371 = vmatprep.subr.mxu0 0.0
        %2372 = vmatpush1.msra.mxu0 0.0
        %2373 = vmatprep.subr.mxu0 0.0
        %2374 = vmatpush1.msra.mxu0 0.0
        %2375 = vmatprep.subr.mxu0 0.0
        %2376 = vmatpush1.msra.mxu0 0.0
        %2377 = vmatprep.subr.mxu0 0.0
        %2378 = vmatpush1.msra.mxu0 0.0
        %2379 = vmatprep.subr.mxu0 0.0
        %2380 = vmatpush1.msra.mxu0 0.0
        %2381 = vmatprep.subr.mxu0 0.0
        %2382 = vmatpush1.msra.mxu0 0.0
        %2383 = vmatprep.subr.mxu0 0.0
        %2384 = vmatpush1.msra.mxu0 0.0
        %2385 = vmatprep.mubr.f32.mxu0 0.0
        %2386 = vmatmul.mubr.f32.gmra.mrb[0].mxu0 %v2274
        %v2387 = vpop.f32.mrb[0].mxu0
        %v2388 = vadd.f32 0.0, %v2387
        %v2389 = vpop.f32.mrb[0].mxu0
        %2390 = vmatprep.mubr.f32.mxu0 0.0
        %2391 = vmatmul.mubr.f32.gmra.mrb[0].mxu0 %v2277
        %v2392 = vpop.f32.mrb[0].mxu0
        %v2393 = vadd.f32 0.0, %v2392
        %v2394 = vpop.f32.mrb[0].mxu0
        %2395 = vmatprep.mubr.f32.mxu0 0.0
        %2396 = vmatmul.mubr.f32.gmra.mrb[0].mxu0 %v2280
        %v2397 = vpop.f32.mrb[0].mxu0
        %v2398 = vadd.f32 0.0, %v2397
        %v2399 = vpop.f32.mrb[0].mxu0
        %2400 = vmatprep.mubr.f32.mxu0 0.0
        %2401 = vmatmul.mubr.f32.gmra.mrb[0].mxu0 %v2283
        %v2402 = vpop.f32.mrb[0].mxu0
        %v2403 = vadd.f32 0.0, %v2402
        %v2404 = vpop.f32.mrb[0].mxu0
        %2405 = vmatprep.mubr.f32.mxu0 0.0
        %2406 = vmatmul.mubr.f32.gmra.mrb[0].mxu0 %v2286
        %v2407 = vpop.f32.mrb[0].mxu0
        %v2408 = vadd.f32 0.0, %v2407
        %v2409 = vpop.f32.mrb[0].mxu0
        %2410 = vmatprep.mubr.f32.mxu0 0.0
        %2411 = vmatmul.mubr.f32.gmra.mrb[0].mxu0 %v2289
        %v2412 = vpop.f32.mrb[0].mxu0
        %v2413 = vadd.f32 0.0, %v2412
        %v2414 = vpop.f32.mrb[0].mxu0
        %2415 = vmatprep.mubr.f32.mxu0 0.0
        %2416 = vmatmul.mubr.f32.gmra.mrb[0].mxu0 %v2292
        %v2417 = vpop.f32.mrb[0].mxu0
        %v2418 = vadd.f32 0.0, %v2417
        %v2419 = vpop.f32.mrb[0].mxu0
        %2420 = vmatprep.mubr.f32.mxu0 0.0
        %2421 = vmatmul.mubr.f32.gmra.mrb[0].mxu0 %v2295
        %v2422 = vpop.f32.mrb[0].mxu0
        %v2423 = vadd.f32 0.0, %v2422
        %v2424 = vpop.f32.mrb[0].mxu0
        %2425 = vmatprep.mubr.f32.mxu0 0.0
        %2426 = vmatmul.mubr.f32.gmra.mrb[0].mxu0 %v2298
        %v2427 = vpop.f32.mrb[0].mxu0
        %v2428 = vadd.f32 0.0, %v2427
        %v2429 = vpop.f32.mrb[0].mxu0
        %2430 = vmatprep.mubr.f32.mxu0 0.0
        %2431 = vmatmul.mubr.f32.gmra.mrb[0].mxu0 %v2301
        %v2432 = vpop.f32.mrb[0].mxu0
        %v2433 = vadd.f32 0.0, %v2432
        %v2434 = vpop.f32.mrb[0].mxu0
        %2435 = vmatprep.mubr.f32.mxu0 0.0
        %2436 = vmatmul.mubr.f32.gmra.mrb[0].mxu0 %v2304
        %v2437 = vpop.f32.mrb[0].mxu0
        %v2438 = vadd.f32 0.0, %v2437
        %v2439 = vpop.f32.mrb[0].mxu0
        %2440 = vmatprep.mubr.f32.mxu0 0.0
        %2441 = vmatmul.mubr.f32.gmra.mrb[0].mxu0 %v2307
        %v2442 = vpop.f32.mrb[0].mxu0
        %v2443 = vadd.f32 0.0, %v2442
        %v2444 = vpop.f32.mrb[0].mxu0
        %2445 = vmatprep.mubr.f32.mxu0 0.0
        %2446 = vmatmul.mubr.f32.gmra.mrb[0].mxu0 %v2310
        %v2447 = vpop.f32.mrb[0].mxu0
        %v2448 = vadd.f32 0.0, %v2447
        %v2449 = vpop.f32.mrb[0].mxu0
        %2450 = vmatprep.mubr.f32.mxu0 0.0
        %2451 = vmatmul.mubr.f32.gmra.mrb[0].mxu0 %v2313
        %v2452 = vpop.f32.mrb[0].mxu0
        %v2453 = vadd.f32 0.0, %v2452
        %v2454 = vpop.f32.mrb[0].mxu0
        %2455 = vmatprep.mubr.f32.mxu0 0.0
        %2456 = vmatmul.mubr.f32.gmra.mrb[0].mxu0 %v2316
        %v2457 = vpop.f32.mrb[0].mxu0
        %v2458 = vadd.f32 0.0, %v2457
        %v2459 = vpop.f32.mrb[0].mxu0
        %2460 = vmatprep.mubr.f32.mxu0 0.0
        %2461 = vmatmul.mubr.f32.gmra.mrb[0].mxu0 %v2319
        %v2462 = vpop.f32.mrb[0].mxu0
        %v2463 = vadd.f32 0.0, %v2462
        %v2464 = vpop.f32.mrb[0].mxu0
        %2465 = vdwg.mxu0
        %v2466 = vadd.f32 %v1737, %v2388
        %v2467 = vadd.f32 %v1738, %v2393
        %v2468 = vadd.f32 %v1739, %v2398
        %v2469 = vadd.f32 %v1740, %v2403
        %v2470 = vadd.f32 %v1741, %v2408
        %v2471 = vadd.f32 %v1742, %v2413
        %v2472 = vadd.f32 %v1743, %v2418
        %v2473 = vadd.f32 %v1744, %v2423
        %v2474 = vadd.f32 %v1745, %v2428
        %v2475 = vadd.f32 %v1746, %v2433
        %v2476 = vadd.f32 %v1747, %v2438
        %v2477 = vadd.f32 %v1748, %v2443
        %v2478 = vadd.f32 %v1749, %v2448
        %v2479 = vadd.f32 %v1750, %v2453
        %v2480 = vadd.f32 %v1751, %v2458
        %v2481 = vadd.f32 %v1752, %v2463
        %2482 = vst [vmem:[%s234] sm:$0xff] %v2466
        %2483 = vst [vmem:[%s234 + $0x8] sm:$0xff] %v2467
        %2484 = vst [vmem:[%s234 + $0x10] sm:$0xff] %v2468
        %2485 = vst [vmem:[%s234 + $0x18] sm:$0xff] %v2469
        %2486 = vst [vmem:[%s234 + $0x20] sm:$0xff] %v2470
        %2487 = vst [vmem:[%s234 + $0x28] sm:$0xff] %v2471
        %2488 = vst [vmem:[%s234 + $0x30] sm:$0xff] %v2472
        %2489 = vst [vmem:[%s234 + $0x38] sm:$0xff] %v2473
        %2490 = vst [vmem:[%s234 + $0x40] sm:$0xff] %v2474
        %2491 = vst [vmem:[%s234 + $0x48] sm:$0xff] %v2475
        %2492 = vst [vmem:[%s234 + $0x50] sm:$0xff] %v2476
        %2493 = vst [vmem:[%s234 + $0x58] sm:$0xff] %v2477
        %2494 = vst [vmem:[%s234 + $0x60] sm:$0xff] %v2478
        %2495 = vst [vmem:[%s234 + $0x68] sm:$0xff] %v2479
        %2496 = vst [vmem:[%s234 + $0x70] sm:$0xff] %v2480
        %2497 = vst [vmem:[%s234 + $0x78] sm:$0xff] %v2481
        %v2498 = vlaneseq
        %v2499 = vshrl.u32 %v2498, 7
        %v2500 = vsub.s32 %v262, %v2499
        %v2501 = vrot.slane %v509, %v2500
        %v2502 = vadd.s32 %v262, 4294967288
        %v2503 = vlaneseq
        %v2504 = vshrl.u32 %v2503, 7
        %v2505 = vsub.s32 %v2502, %v2504
        %v2506 = vrot.slane %v524, %v2505
        %vm2507 = vcmask 130112
        %v2508 = vsel %vm2507, %v2506, %v2501
        %v2509 = vadd.s32 %v262, 4294967280
        %v2510 = vlaneseq
        %v2511 = vshrl.u32 %v2510, 7
        %v2512 = vsub.s32 %v2509, %v2511
        %v2513 = vrot.slane %v539, %v2512
        %vm2514 = vcmask 195712
        %v2515 = vsel %vm2514, %v2513, %v2508
        %v2516 = vadd.s32 %v262, 4294967272
        %v2517 = vlaneseq
        %v2518 = vshrl.u32 %v2517, 7
        %v2519 = vsub.s32 %v2516, %v2518
        %v2520 = vrot.slane %v554, %v2519
        %vm2521 = vcmask 261312
        %v2522 = vsel %vm2521, %v2520, %v2515
        %v2523 = vadd.s32 %v262, 4294967264
        %v2524 = vlaneseq
        %v2525 = vshrl.u32 %v2524, 7
        %v2526 = vsub.s32 %v2523, %v2525
        %v2527 = vrot.slane %v569, %v2526
        %vm2528 = vcmask 326912
        %v2529 = vsel %vm2528, %v2527, %v2522
        %v2530 = vadd.s32 %v262, 4294967256
        %v2531 = vlaneseq
        %v2532 = vshrl.u32 %v2531, 7
        %v2533 = vsub.s32 %v2530, %v2532
        %v2534 = vrot.slane %v584, %v2533
        %vm2535 = vcmask 392512
        %v2536 = vsel %vm2535, %v2534, %v2529
        %v2537 = vadd.s32 %v262, 4294967248
        %v2538 = vlaneseq
        %v2539 = vshrl.u32 %v2538, 7
        %v2540 = vsub.s32 %v2537, %v2539
        %v2541 = vrot.slane %v599, %v2540
        %vm2542 = vcmask 458112
        %v2543 = vsel %vm2542, %v2541, %v2536
        %v2544 = vadd.s32 %v262, 4294967240
        %v2545 = vlaneseq
        %v2546 = vshrl.u32 %v2545, 7
        %v2547 = vsub.s32 %v2544, %v2546
        %v2548 = vrot.slane %v614, %v2547
        %vm2549 = vcmask 523712
        %v2550 = vsel %vm2549, %v2548, %v2543
        %v2551 = vadd.s32 %v262, 4294967232
        %v2552 = vlaneseq
        %v2553 = vshrl.u32 %v2552, 7
        %v2554 = vsub.s32 %v2551, %v2553
        %v2555 = vrot.slane %v629, %v2554
        %vm2556 = vcmask 589312
        %v2557 = vsel %vm2556, %v2555, %v2550
        %v2558 = vadd.s32 %v262, 4294967224
        %v2559 = vlaneseq
        %v2560 = vshrl.u32 %v2559, 7
        %v2561 = vsub.s32 %v2558, %v2560
        %v2562 = vrot.slane %v644, %v2561
        %vm2563 = vcmask 654912
        %v2564 = vsel %vm2563, %v2562, %v2557
        %v2565 = vadd.s32 %v262, 4294967216
        %v2566 = vlaneseq
        %v2567 = vshrl.u32 %v2566, 7
        %v2568 = vsub.s32 %v2565, %v2567
        %v2569 = vrot.slane %v659, %v2568
        %vm2570 = vcmask 720512
        %v2571 = vsel %vm2570, %v2569, %v2564
        %v2572 = vadd.s32 %v262, 4294967208
        %v2573 = vlaneseq
        %v2574 = vshrl.u32 %v2573, 7
        %v2575 = vsub.s32 %v2572, %v2574
        %v2576 = vrot.slane %v674, %v2575
        %vm2577 = vcmask 786112
        %v2578 = vsel %vm2577, %v2576, %v2571
        %v2579 = vadd.s32 %v262, 4294967200
        %v2580 = vlaneseq
        %v2581 = vshrl.u32 %v2580, 7
        %v2582 = vsub.s32 %v2579, %v2581
        %v2583 = vrot.slane %v689, %v2582
        %vm2584 = vcmask 851712
        %v2585 = vsel %vm2584, %v2583, %v2578
        %v2586 = vadd.s32 %v262, 4294967192
        %v2587 = vlaneseq
        %v2588 = vshrl.u32 %v2587, 7
        %v2589 = vsub.s32 %v2586, %v2588
        %v2590 = vrot.slane %v704, %v2589
        %vm2591 = vcmask 917312
        %v2592 = vsel %vm2591, %v2590, %v2585
        %v2593 = vadd.s32 %v262, 4294967184
        %v2594 = vlaneseq
        %v2595 = vshrl.u32 %v2594, 7
        %v2596 = vsub.s32 %v2593, %v2595
        %v2597 = vrot.slane %v719, %v2596
        %vm2598 = vcmask 982912
        %v2599 = vsel %vm2598, %v2597, %v2592
        %v2600 = vadd.s32 %v262, 4294967176
        %v2601 = vlaneseq
        %v2602 = vshrl.u32 %v2601, 7
        %v2603 = vsub.s32 %v2600, %v2602
        %v2604 = vrot.slane %v734, %v2603
        %vm2605 = vcmask 1048512
        %v2606 = vsel %vm2605, %v2604, %v2599
        %v2607 = vlaneseq
        %v2608 = vshrl.u32 %v2607, 7
        %v2609 = vsub.s32 %v262, %v2608
        %v2610 = vrot.slane %v1254, %v2609
        %v2611 = vlaneseq
        %v2612 = vshrl.u32 %v2611, 7
        %v2613 = vsub.s32 %v2502, %v2612
        %v2614 = vrot.slane %v1269, %v2613
        %v2615 = vsel %vm2507, %v2614, %v2610
        %v2616 = vlaneseq
        %v2617 = vshrl.u32 %v2616, 7
        %v2618 = vsub.s32 %v2509, %v2617
        %v2619 = vrot.slane %v1284, %v2618
        %v2620 = vsel %vm2514, %v2619, %v2615
        %v2621 = vlaneseq
        %v2622 = vshrl.u32 %v2621, 7
        %v2623 = vsub.s32 %v2516, %v2622
        %v2624 = vrot.slane %v1299, %v2623
        %v2625 = vsel %vm2521, %v2624, %v2620
        %v2626 = vlaneseq
        %v2627 = vshrl.u32 %v2626, 7
        %v2628 = vsub.s32 %v2523, %v2627
        %v2629 = vrot.slane %v1314, %v2628
        %v2630 = vsel %vm2528, %v2629, %v2625
        %v2631 = vlaneseq
        %v2632 = vshrl.u32 %v2631, 7
        %v2633 = vsub.s32 %v2530, %v2632
        %v2634 = vrot.slane %v1329, %v2633
        %v2635 = vsel %vm2535, %v2634, %v2630
        %v2636 = vlaneseq
        %v2637 = vshrl.u32 %v2636, 7
        %v2638 = vsub.s32 %v2537, %v2637
        %v2639 = vrot.slane %v1344, %v2638
        %v2640 = vsel %vm2542, %v2639, %v2635
        %v2641 = vlaneseq
        %v2642 = vshrl.u32 %v2641, 7
        %v2643 = vsub.s32 %v2544, %v2642
        %v2644 = vrot.slane %v1359, %v2643
        %v2645 = vsel %vm2549, %v2644, %v2640
        %v2646 = vlaneseq
        %v2647 = vshrl.u32 %v2646, 7
        %v2648 = vsub.s32 %v2551, %v2647
        %v2649 = vrot.slane %v1374, %v2648
        %v2650 = vsel %vm2556, %v2649, %v2645
        %v2651 = vlaneseq
        %v2652 = vshrl.u32 %v2651, 7
        %v2653 = vsub.s32 %v2558, %v2652
        %v2654 = vrot.slane %v1389, %v2653
        %v2655 = vsel %vm2563, %v2654, %v2650
        %v2656 = vlaneseq
        %v2657 = vshrl.u32 %v2656, 7
        %v2658 = vsub.s32 %v2565, %v2657
        %v2659 = vrot.slane %v1404, %v2658
        %v2660 = vsel %vm2570, %v2659, %v2655
        %v2661 = vlaneseq
        %v2662 = vshrl.u32 %v2661, 7
        %v2663 = vsub.s32 %v2572, %v2662
        %v2664 = vrot.slane %v1419, %v2663
        %v2665 = vsel %vm2577, %v2664, %v2660
        %v2666 = vlaneseq
        %v2667 = vshrl.u32 %v2666, 7
        %v2668 = vsub.s32 %v2579, %v2667
        %v2669 = vrot.slane %v1434, %v2668
        %v2670 = vsel %vm2584, %v2669, %v2665
        %v2671 = vlaneseq
        %v2672 = vshrl.u32 %v2671, 7
        %v2673 = vsub.s32 %v2586, %v2672
        %v2674 = vrot.slane %v1449, %v2673
        %v2675 = vsel %vm2591, %v2674, %v2670
        %v2676 = vlaneseq
        %v2677 = vshrl.u32 %v2676, 7
        %v2678 = vsub.s32 %v2593, %v2677
        %v2679 = vrot.slane %v1464, %v2678
        %v2680 = vsel %vm2598, %v2679, %v2675
        %v2681 = vlaneseq
        %v2682 = vshrl.u32 %v2681, 7
        %v2683 = vsub.s32 %v2600, %v2682
        %v2684 = vrot.slane %v1479, %v2683
        %v2685 = vsel %vm2605, %v2684, %v2680
        %v2686 = vlaneseq
        %v2687 = vshrl.u32 %v2686, 7
        %v2688 = vsub.s32 %v262, %v2687
        %v2689 = vrot.slane %v1999, %v2688
        %v2690 = vlaneseq
        %v2691 = vshrl.u32 %v2690, 7
        %v2692 = vsub.s32 %v2502, %v2691
        %v2693 = vrot.slane %v2014, %v2692
        %v2694 = vsel %vm2507, %v2693, %v2689
        %v2695 = vlaneseq
        %v2696 = vshrl.u32 %v2695, 7
        %v2697 = vsub.s32 %v2509, %v2696
        %v2698 = vrot.slane %v2029, %v2697
        %v2699 = vsel %vm2514, %v2698, %v2694
        %v2700 = vlaneseq
        %v2701 = vshrl.u32 %v2700, 7
        %v2702 = vsub.s32 %v2516, %v2701
        %v2703 = vrot.slane %v2044, %v2702
        %v2704 = vsel %vm2521, %v2703, %v2699
        %v2705 = vlaneseq
        %v2706 = vshrl.u32 %v2705, 7
        %v2707 = vsub.s32 %v2523, %v2706
        %v2708 = vrot.slane %v2059, %v2707
        %v2709 = vsel %vm2528, %v2708, %v2704
        %v2710 = vlaneseq
        %v2711 = vshrl.u32 %v2710, 7
        %v2712 = vsub.s32 %v2530, %v2711
        %v2713 = vrot.slane %v2074, %v2712
        %v2714 = vsel %vm2535, %v2713, %v2709
        %v2715 = vlaneseq
        %v2716 = vshrl.u32 %v2715, 7
        %v2717 = vsub.s32 %v2537, %v2716
        %v2718 = vrot.slane %v2089, %v2717
        %v2719 = vsel %vm2542, %v2718, %v2714
        %v2720 = vlaneseq
        %v2721 = vshrl.u32 %v2720, 7
        %v2722 = vsub.s32 %v2544, %v2721
        %v2723 = vrot.slane %v2104, %v2722
        %v2724 = vsel %vm2549, %v2723, %v2719
        %v2725 = vlaneseq
        %v2726 = vshrl.u32 %v2725, 7
        %v2727 = vsub.s32 %v2551, %v2726
        %v2728 = vrot.slane %v2119, %v2727
        %v2729 = vsel %vm2556, %v2728, %v2724
        %v2730 = vlaneseq
        %v2731 = vshrl.u32 %v2730, 7
        %v2732 = vsub.s32 %v2558, %v2731
        %v2733 = vrot.slane %v2134, %v2732
        %v2734 = vsel %vm2563, %v2733, %v2729
        %v2735 = vlaneseq
        %v2736 = vshrl.u32 %v2735, 7
        %v2737 = vsub.s32 %v2565, %v2736
        %v2738 = vrot.slane %v2149, %v2737
        %v2739 = vsel %vm2570, %v2738, %v2734
        %v2740 = vlaneseq
        %v2741 = vshrl.u32 %v2740, 7
        %v2742 = vsub.s32 %v2572, %v2741
        %v2743 = vrot.slane %v2164, %v2742
        %v2744 = vsel %vm2577, %v2743, %v2739
        %v2745 = vlaneseq
        %v2746 = vshrl.u32 %v2745, 7
        %v2747 = vsub.s32 %v2579, %v2746
        %v2748 = vrot.slane %v2179, %v2747
        %v2749 = vsel %vm2584, %v2748, %v2744
        %v2750 = vlaneseq
        %v2751 = vshrl.u32 %v2750, 7
        %v2752 = vsub.s32 %v2586, %v2751
        %v2753 = vrot.slane %v2194, %v2752
        %v2754 = vsel %vm2591, %v2753, %v2749
        %v2755 = vlaneseq
        %v2756 = vshrl.u32 %v2755, 7
        %v2757 = vsub.s32 %v2593, %v2756
        %v2758 = vrot.slane %v2209, %v2757
        %v2759 = vsel %vm2598, %v2758, %v2754
        %v2760 = vlaneseq
        %v2761 = vshrl.u32 %v2760, 7
        %v2762 = vsub.s32 %v2600, %v2761
        %v2763 = vrot.slane %v2224, %v2762
        %v2764 = vsel %vm2605, %v2763, %v2759
        %vm2765 = vcmask 1040384
        %v2766 = vsel %vm2765, %v2606, %v2685
        %vm2767 = vcmask 1041408
        %v2768 = vsel %vm2767, %v2766, %v2764
        %2769 = vst [vmem:[%s241] sm:$0x7] %v2768
        %s2770 = sand.u32 %s102, 1
        %s2771 = scalar_lea.sflag [#allocation4], %s2770
        %s2772 = sand.u32 %s102, 1
        %s2773 = smul.addr %s2772, 128
        %s2774 = scalar_lea.vmem [#allocation7], %s2773
        %s2775 = sand.u32 %s128, 1
        %s2776 = scalar_lea.sflag [#allocation9], %s2775
        %s2777 = sand.u32 %s128, 1
        %s2778 = smul.addr %s2777, 4
        %s2779 = scalar_lea.vmem [#allocation8], %s2778
        // Predicated region
        $region41: #{tpu_custom_call.1} parent=31 // pred_check
          %p2780 = pneg %p112
        $region42: #{tpu_custom_call.1} parent=31 // pred_check_branch
          %2782 = sbr.rel (%p2780) target = $region44
        $region43: #{tpu_custom_call.1} parent=31 // pred_region
          %s2783 = smul.u32 16, %s26
          %s2785 = ssub.s32 2048, 2048
          %2786 = vsyncadd %s2771, %s2785
          %s2787 = smul.addr %s2783, 128
          %s2788 = scalar_lea.hbm %s3, %s2787
          %s2789 = sshll.u32 %s2774, 4
          %s2790 = int_to_ptr.vmem [resolvable:$true] %s2789
          %2795 = dma.vmem_to_hbm [thread:$0]  %s2790, 2048, %s2788, %s2771, 128, 128, 8
        $region44: #{tpu_custom_call.1} parent=31 // pred_fallthru
          _
        // Predicated region
        $region45: #{tpu_custom_call.1} parent=31 // pred_check
          %p2796 = pneg %p138
        $region46: #{tpu_custom_call.1} parent=31 // pred_check_branch
          %2798 = sbr.rel (%p2796) target = $region48
        $region47: #{tpu_custom_call.1} parent=31 // pred_region
          %s2800 = ssub.s32 64, 64
          %2801 = vsyncadd %s2776, %s2800
          %s2802 = smul.addr %s26, 64
          %s2803 = scalar_lea.hbm %s4, %s2802
          %s2805 = sshll.u32 %s2779, 4
          %s2806 = int_to_ptr.vmem [resolvable:$true] %s2805
          %2808 = dma.vmem_to_hbm [thread:$0]  %s2806, 64, %s2803, %s2776
        $region48: #{tpu_custom_call.1} parent=31 // pred_fallthru
          _
      $region32: #{tpu_custom_call.1} parent=5 // pred_fallthru
        _
      %p2809 = scmp.le.s32.totalorder 2, %s21
      // Predicated region
      $region49: #{tpu_custom_call.1} parent=5 // pred_check
        %p2810 = pneg %p2809
      $region50: #{tpu_custom_call.1} parent=5 // pred_check_branch
        %2812 = sbr.rel (%p2810) target = $region52
      $region51: #{tpu_custom_call.1} parent=5 // pred_region
        %s2813 = ssub.s32 %s21, 2
        // Predicated region
        $region53: #{tpu_custom_call.1} parent=51 // pred_check
          %p2814 = pneg %p118
        $region54: #{tpu_custom_call.1} parent=51 // pred_check_branch
          %2816 = sbr.rel (%p2814) target = $region56
        $region55: #{tpu_custom_call.1} parent=51 // pred_region
          %s2817 = sand.u32 %s103, 1
          %s2818 = scalar_lea.sflag [#allocation4], %s2817
          %s2819 = sand.u32 %s103, 1
          %s2820 = smul.addr %s2819, 128
          %s2821 = scalar_lea.vmem [#allocation7], %s2820
          %2822 = dma.done %s2818, 2048
        $region56: #{tpu_custom_call.1} parent=51 // pred_fallthru
          _
        // Predicated region
        $region57: #{tpu_custom_call.1} parent=51 // pred_check
          %p2823 = pneg %p144
        $region58: #{tpu_custom_call.1} parent=51 // pred_check_branch
          %2825 = sbr.rel (%p2823) target = $region60
        $region59: #{tpu_custom_call.1} parent=51 // pred_region
          %s2826 = sand.u32 %s129, 1
          %s2827 = scalar_lea.sflag [#allocation9], %s2826
          %s2828 = sand.u32 %s129, 1
          %s2829 = smul.addr %s2828, 4
          %s2830 = scalar_lea.vmem [#allocation8], %s2829
          %2831 = dma.done %s2827, 64
        $region60: #{tpu_custom_call.1} parent=51 // pred_fallthru
          _
      $region52: #{tpu_custom_call.1} parent=5 // pred_fallthru
        _
    $region6: #{tpu_custom_call.1} parent=1 // loop_footer
      %s25 = sadd.s32 1, %s21
    $region7: #{tpu_custom_call.1} parent=1 // loop_footer_branch
      %20 = sbr.rel target = $region3
    $region8: #{tpu_custom_call.1} parent=1 // loop_exit
      _
    %2832 = vsyncpa [#allocation3], 1
    %s2833 = scalar_lea.sflag [#allocation3], 1
    %2834 = vsyncpa %s2833, 1
    %2835 = vsyncpa [#allocation6], 1
    %2836 = vsyncpa [#allocation4], 1
    %s2837 = scalar_lea.sflag [#allocation4], 1
    %2838 = vsyncpa %s2837, 1
    %2839 = vsyncpa [#allocation9], 1
    %s2840 = scalar_lea.sflag [#allocation9], 1
    %2841 = vsyncpa %s2840, 1

</llo_original>
